<compile_context>
chip_gen: v7x
topology: tpu7x:2x2x1
jax: 0.10.0
libtpu: 0.0.40
codegen_flags: <defaults>
</compile_context>

<pallas_src>
import functools

import jax
import jax.numpy as jnp
from jax.experimental import pallas as pl
from jax.experimental.pallas import tpu as pltpu

# ---- module hyperparameters (defaults of the PyTorch MLP, scaled small) ----
N_LAYERS = 3          # nn default is 5; small-but-faithful trunk
UNITS = 128           # nn default is 1024
INP_DIM = 32
OUT_SHAPE = (8,)      # self._shape -> mean_layer out dim = prod(shape)
BATCH = 256
TILE_M = 128          # rows per grid step (f32 sublane-aligned, MXU-friendly)
LN_EPS = 1e-3
STD = 1.0
MIN_STD = 0.1
MAX_STD = 1.0

# TODO(synk): at production sizes (units=1024, layers=5) switch weights to bf16
# and/or stream per-layer weight tiles (P4 manual double-buffer) to respect
# v7x's 64 MiB VMEM; at these shapes everything fits comfortably.


def _mlp_kernel(n_layers, *refs):
    """refs = [x, (w_i, gamma_i, beta_i) * n_layers, w_mean, b_mean, mean_out]"""
    x_ref = refs[0]
    idx = 1
    h = x_ref[...].astype(jnp.float32)

    for _ in range(n_layers):
        w_ref = refs[idx]
        g_ref = refs[idx + 1]
        b_ref = refs[idx + 2]
        idx += 3
        # Linear (bias=False) on the MXU, f32 accumulation.
        h = jnp.dot(h, w_ref[...], preferred_element_type=jnp.float32)
        # LayerNorm(units, eps=1e-3), biased variance, affine fused:
        #   var   = E[h^2] - mu^2           (both XLU reductions back-to-back)
        #   scale = gamma * rsqrt(var+eps)
        #   shift = beta - mu * scale
        #   h     = h * scale + shift
        mu = jnp.mean(h, axis=-1, keepdims=True)
        ex2 = jnp.mean(h * h, axis=-1, keepdims=True)
        var = ex2 - mu * mu
        scale = g_ref[...] * jax.lax.rsqrt(var + LN_EPS)
        shift = b_ref[...] - mu * scale
        h = h * scale + shift
        # SiLU (sigmoid goes to the EUP, mul to the VPU).
        h = h * jax.nn.sigmoid(h)

    w_mean_ref = refs[idx]
    b_mean_ref = refs[idx + 1]
    mean_ref = refs[idx + 2]

    mean = jnp.dot(h, w_mean_ref[...], preferred_element_type=jnp.float32)
    mean = mean + b_mean_ref[...]
    # dist == 'normal' branch of MLP.dist(): mean = tanh(mean)
    mean_ref[...] = jnp.tanh(mean)


def mlp_forward(x, params, *, tile_m=TILE_M):
    """params: dict with 'w' (list), 'gamma' (list), 'beta' (list),
    'w_mean', 'b_mean'.  Returns (mean, std)."""
    n_layers = len(params["w"])
    out_dim = params["w_mean"].shape[1]
    batch, inp_dim = x.shape

    # Pad batch up to a multiple of tile_m so the grid tiles evenly.
    n_blocks = pl.cdiv(batch, tile_m)
    b_pad = n_blocks * tile_m
    if b_pad != batch:
        x = jnp.pad(x, ((0, b_pad - batch), (0, 0)))

    # Lane-dense output: pad mean-layer columns to a multiple of 128 so the
    # output store is a full-width unmasked vst; slice back after the call.
    out_pad = pl.cdiv(out_dim, 128) * 128
    w_mean = params["w_mean"]
    b_mean = params["b_mean"]
    if out_pad != out_dim:
        w_mean = jnp.pad(w_mean, ((0, 0), (0, out_pad - out_dim)))
        b_mean = jnp.pad(b_mean, ((0, 0), (0, out_pad - out_dim)))

    flat_inputs = [x]
    in_specs = [pl.BlockSpec((tile_m, inp_dim), lambda i: (i, 0))]
    for li in range(n_layers):
        w = params["w"][li]
        g = params["gamma"][li]
        b = params["beta"][li]
        flat_inputs += [w, g, b]
        # Weights/affine stay VMEM-resident across all grid steps
        # (index_map always returns block (0, 0) -> no re-DMA per step).
        in_specs += [
            pl.BlockSpec(w.shape, lambda i: (0, 0)),
            pl.BlockSpec(g.shape, lambda i: (0, 0)),
            pl.BlockSpec(b.shape, lambda i: (0, 0)),
        ]
    flat_inputs += [w_mean, b_mean]
    in_specs += [
        pl.BlockSpec(w_mean.shape, lambda i: (0, 0)),
        pl.BlockSpec(b_mean.shape, lambda i: (0, 0)),
    ]

    mean_padded = pl.pallas_call(
        functools.partial(_mlp_kernel, n_layers),
        out_shape=jax.ShapeDtypeStruct((b_pad, out_pad), jnp.float32),
        grid=(n_blocks,),
        in_specs=in_specs,
        out_specs=pl.BlockSpec((tile_m, out_pad), lambda i: (i, 0)),
        compiler_params=pltpu.CompilerParams(
            dimension_semantics=("parallel",)),
    )(*flat_inputs)

    mean = mean_padded[:batch, :out_dim]

    # std is data-independent; evaluated once in the wrapper, broadcast to the
    # event shape the Normal distribution expects.
    std_val = (MAX_STD - MIN_STD) * jax.nn.sigmoid(jnp.float32(STD) + 2.0) + MIN_STD
    std = jnp.full_like(mean, std_val)
    return mean, std


def init_params(key):
    """Deterministic synthetic parameters matching the module's shapes."""
    ks = jax.random.split(key, N_LAYERS + 2)
    ws, gammas, betas = [], [], []
    in_dim = INP_DIM
    for i in range(N_LAYERS):
        # stored as (in, out) == transpose of torch Linear's (out, in)
        w = jax.random.normal(ks[i], (in_dim, UNITS), jnp.float32)
        w = w / jnp.sqrt(jnp.float32(in_dim))
        ws.append(w)
        gammas.append(jnp.ones((1, UNITS), jnp.float32))
        betas.append(jnp.zeros((1, UNITS), jnp.float32))
        in_dim = UNITS
    out_dim = 1
    for d in OUT_SHAPE:
        out_dim *= d
    w_mean = jax.random.normal(ks[N_LAYERS], (UNITS, out_dim), jnp.float32)
    w_mean = w_mean / jnp.sqrt(jnp.float32(UNITS))
    b_mean = jnp.zeros((1, out_dim), jnp.float32)
    return {
        "w": ws,
        "gamma": gammas,
        "beta": betas,
        "w_mean": w_mean,
        "b_mean": b_mean,
    }


def reference_forward(x, params):
    """Pure-JAX reference mirroring the PyTorch forward."""
    h = x.astype(jnp.float32)
    for i in range(len(params["w"])):
        h = h @ params["w"][i]
        mu = jnp.mean(h, axis=-1, keepdims=True)
        var = jnp.mean((h - mu) ** 2, axis=-1, keepdims=True)
        h = (h - mu) / jnp.sqrt(var + LN_EPS)
        h = h * params["gamma"][i] + params["beta"][i]
        h = h * jax.nn.sigmoid(h)
    mean = h @ params["w_mean"] + params["b_mean"]
    mean = jnp.tanh(mean)
    std = (MAX_STD - MIN_STD) * jax.nn.sigmoid(jnp.float32(STD) + 2.0) + MIN_STD
    return mean, jnp.full_like(mean, std)


if __name__ == "__main__":
    key = jax.random.PRNGKey(0)
    k_x, k_p = jax.random.split(key)
    x = jax.random.normal(k_x, (BATCH, INP_DIM), jnp.float32)
    params = init_params(k_p)

    mean, std = mlp_forward(x, params)
    jax.block_until_ready((mean, std))

    mean_ref, std_ref = reference_forward(x, params)
    out_dim = 1
    for d in OUT_SHAPE:
        out_dim *= d
    assert mean.shape == (BATCH, out_dim)
    assert std.shape == (BATCH, out_dim)
    assert jnp.allclose(mean, mean_ref, atol=1e-4, rtol=1e-4)
    assert jnp.allclose(std, std_ref, atol=1e-6)
    print("KERNEL_OK")
</pallas_src>

<mosaic_0001>
module attributes {stable_mosaic.version = 11 : i64} {
  func.func @_mlp_kernel(%arg0: i32, %arg1: memref<128x32xf32, #tpu.memory_space<vmem>>, %arg2: memref<32x128xf32, #tpu.memory_space<vmem>>, %arg3: memref<1x128xf32, #tpu.memory_space<vmem>>, %arg4: memref<1x128xf32, #tpu.memory_space<vmem>>, %arg5: memref<128x128xf32, #tpu.memory_space<vmem>>, %arg6: memref<1x128xf32, #tpu.memory_space<vmem>>, %arg7: memref<1x128xf32, #tpu.memory_space<vmem>>, %arg8: memref<128x128xf32, #tpu.memory_space<vmem>>, %arg9: memref<1x128xf32, #tpu.memory_space<vmem>>, %arg10: memref<1x128xf32, #tpu.memory_space<vmem>>, %arg11: memref<128x128xf32, #tpu.memory_space<vmem>>, %arg12: memref<1x128xf32, #tpu.memory_space<vmem>>, %arg13: memref<128x128xf32, #tpu.memory_space<vmem>>) attributes {dimension_semantics = [#tpu.dimension_semantics<parallel>], iteration_bounds = array<i64: 2>, scalar_prefetch = 0 : i64, scratch_operands = 0 : i64, tpu.core_type = #tpu.core_type<tc>, window_params = [{transform_indices = @transform_0, window_bounds = array<i64: 128, 32>}, {pipeline_mode = #tpu.pipeline_mode<synchronous>, transform_indices = @transform_1, window_bounds = array<i64: 32, 128>}, {pipeline_mode = #tpu.pipeline_mode<synchronous>, transform_indices = @transform_2, window_bounds = array<i64: 1, 128>}, {pipeline_mode = #tpu.pipeline_mode<synchronous>, transform_indices = @transform_3, window_bounds = array<i64: 1, 128>}, {pipeline_mode = #tpu.pipeline_mode<synchronous>, transform_indices = @transform_4, window_bounds = array<i64: 128, 128>}, {pipeline_mode = #tpu.pipeline_mode<synchronous>, transform_indices = @transform_5, window_bounds = array<i64: 1, 128>}, {pipeline_mode = #tpu.pipeline_mode<synchronous>, transform_indices = @transform_6, window_bounds = array<i64: 1, 128>}, {pipeline_mode = #tpu.pipeline_mode<synchronous>, transform_indices = @transform_7, window_bounds = array<i64: 128, 128>}, {pipeline_mode = #tpu.pipeline_mode<synchronous>, transform_indices = @transform_8, window_bounds = array<i64: 1, 128>}, {pipeline_mode = #tpu.pipeline_mode<synchronous>, transform_indices = @transform_9, window_bounds = array<i64: 1, 128>}, {pipeline_mode = #tpu.pipeline_mode<synchronous>, transform_indices = @transform_10, window_bounds = array<i64: 128, 128>}, {pipeline_mode = #tpu.pipeline_mode<synchronous>, transform_indices = @transform_11, window_bounds = array<i64: 1, 128>}, {transform_indices = @transform_12, window_bounds = array<i64: 128, 128>}]} {
    %c0 = arith.constant 0 : index
    %c0_0 = arith.constant 0 : index
    %0 = vector.load %arg1[%c0, %c0_0] : memref<128x32xf32, #tpu.memory_space<vmem>>, vector<128x32xf32>
    %c0_1 = arith.constant 0 : index
    %c0_2 = arith.constant 0 : index
    %1 = vector.load %arg2[%c0_1, %c0_2] : memref<32x128xf32, #tpu.memory_space<vmem>>, vector<32x128xf32>
    %cst = arith.constant dense<0.000000e+00> : vector<128x128xf32>
    %2 = tpu.matmul %0, %1, %cst {dimension_numbers = #tpu.dot_dimension_numbers<[1], [0], [0], [1], [0, 0, 1, 1], [], []>} : vector<128x32xf32>, vector<32x128xf32>, vector<128x128xf32> -> vector<128x128xf32>
    %cst_3 = arith.constant dense<0.000000e+00> : vector<128xf32>
    %3 = vector.multi_reduction <add>, %2, %cst_3 [1] : vector<128x128xf32> to vector<128xf32>
    %4 = vector.shape_cast %3 : vector<128xf32> to vector<128x1xf32>
    %cst_4 = arith.constant 1.280000e+02 : f32
    %5 = vector.broadcast %cst_4 : f32 to vector<128x1xf32>
    %6 = arith.divf %4, %5 : vector<128x1xf32>
    %7 = arith.mulf %2, %2 : vector<128x128xf32>
    %cst_5 = arith.constant dense<0.000000e+00> : vector<128xf32>
    %8 = vector.multi_reduction <add>, %7, %cst_5 [1] : vector<128x128xf32> to vector<128xf32>
    %9 = vector.shape_cast %8 : vector<128xf32> to vector<128x1xf32>
    %cst_6 = arith.constant 1.280000e+02 : f32
    %10 = vector.broadcast %cst_6 : f32 to vector<128x1xf32>
    %11 = arith.divf %9, %10 : vector<128x1xf32>
    %12 = arith.mulf %6, %6 : vector<128x1xf32>
    %13 = arith.subf %11, %12 : vector<128x1xf32>
    %c0_7 = arith.constant 0 : index
    %c0_8 = arith.constant 0 : index
    %14 = vector.load %arg3[%c0_7, %c0_8] : memref<1x128xf32, #tpu.memory_space<vmem>>, vector<1x128xf32>
    %cst_9 = arith.constant 1.000000e-03 : f32
    %15 = vector.broadcast %cst_9 : f32 to vector<128x1xf32>
    %16 = arith.addf %13, %15 : vector<128x1xf32>
    %17 = math.rsqrt %16 : vector<128x1xf32>
    %18 = vector.broadcast %14 : vector<1x128xf32> to vector<128x128xf32>
    %19 = vector.broadcast %17 : vector<128x1xf32> to vector<128x128xf32>
    %20 = arith.mulf %18, %19 : vector<128x128xf32>
    %c0_10 = arith.constant 0 : index
    %c0_11 = arith.constant 0 : index
    %21 = vector.load %arg4[%c0_10, %c0_11] : memref<1x128xf32, #tpu.memory_space<vmem>>, vector<1x128xf32>
    %22 = vector.broadcast %6 : vector<128x1xf32> to vector<128x128xf32>
    %23 = arith.mulf %22, %20 : vector<128x128xf32>
    %24 = vector.broadcast %21 : vector<1x128xf32> to vector<128x128xf32>
    %25 = arith.subf %24, %23 : vector<128x128xf32>
    %26 = arith.mulf %2, %20 : vector<128x128xf32>
    %27 = arith.addf %26, %25 : vector<128x128xf32>
    %28 = arith.negf %27 : vector<128x128xf32>
    %29 = math.exp %28 : vector<128x128xf32>
    %cst_12 = arith.constant 1.000000e+00 : f32
    %30 = vector.broadcast %cst_12 : f32 to vector<128x128xf32>
    %31 = arith.addf %30, %29 : vector<128x128xf32>
    %32 = arith.divf %30, %31 : vector<128x128xf32>
    %33 = arith.mulf %27, %32 : vector<128x128xf32>
    %c0_13 = arith.constant 0 : index
    %c0_14 = arith.constant 0 : index
    %34 = vector.load %arg5[%c0_13, %c0_14] : memref<128x128xf32, #tpu.memory_space<vmem>>, vector<128x128xf32>
    %cst_15 = arith.constant dense<0.000000e+00> : vector<128x128xf32>
    %35 = tpu.matmul %33, %34, %cst_15 {dimension_numbers = #tpu.dot_dimension_numbers<[1], [0], [0], [1], [0, 0, 1, 1], [], []>} : vector<128x128xf32>, vector<128x128xf32>, vector<128x128xf32> -> vector<128x128xf32>
    %cst_16 = arith.constant dense<0.000000e+00> : vector<128xf32>
    %36 = vector.multi_reduction <add>, %35, %cst_16 [1] : vector<128x128xf32> to vector<128xf32>
    %37 = vector.shape_cast %36 : vector<128xf32> to vector<128x1xf32>
    %cst_17 = arith.constant 1.280000e+02 : f32
    %38 = vector.broadcast %cst_17 : f32 to vector<128x1xf32>
    %39 = arith.divf %37, %38 : vector<128x1xf32>
    %40 = arith.mulf %35, %35 : vector<128x128xf32>
    %cst_18 = arith.constant dense<0.000000e+00> : vector<128xf32>
    %41 = vector.multi_reduction <add>, %40, %cst_18 [1] : vector<128x128xf32> to vector<128xf32>
    %42 = vector.shape_cast %41 : vector<128xf32> to vector<128x1xf32>
    %cst_19 = arith.constant 1.280000e+02 : f32
    %43 = vector.broadcast %cst_19 : f32 to vector<128x1xf32>
    %44 = arith.divf %42, %43 : vector<128x1xf32>
    %45 = arith.mulf %39, %39 : vector<128x1xf32>
    %46 = arith.subf %44, %45 : vector<128x1xf32>
    %c0_20 = arith.constant 0 : index
    %c0_21 = arith.constant 0 : index
    %47 = vector.load %arg6[%c0_20, %c0_21] : memref<1x128xf32, #tpu.memory_space<vmem>>, vector<1x128xf32>
    %cst_22 = arith.constant 1.000000e-03 : f32
    %48 = vector.broadcast %cst_22 : f32 to vector<128x1xf32>
    %49 = arith.addf %46, %48 : vector<128x1xf32>
    %50 = math.rsqrt %49 : vector<128x1xf32>
    %51 = vector.broadcast %47 : vector<1x128xf32> to vector<128x128xf32>
    %52 = vector.broadcast %50 : vector<128x1xf32> to vector<128x128xf32>
    %53 = arith.mulf %51, %52 : vector<128x128xf32>
    %c0_23 = arith.constant 0 : index
    %c0_24 = arith.constant 0 : index
    %54 = vector.load %arg7[%c0_23, %c0_24] : memref<1x128xf32, #tpu.memory_space<vmem>>, vector<1x128xf32>
    %55 = vector.broadcast %39 : vector<128x1xf32> to vector<128x128xf32>
    %56 = arith.mulf %55, %53 : vector<128x128xf32>
    %57 = vector.broadcast %54 : vector<1x128xf32> to vector<128x128xf32>
    %58 = arith.subf %57, %56 : vector<128x128xf32>
    %59 = arith.mulf %35, %53 : vector<128x128xf32>
    %60 = arith.addf %59, %58 : vector<128x128xf32>
    %61 = arith.negf %60 : vector<128x128xf32>
    %62 = math.exp %61 : vector<128x128xf32>
    %cst_25 = arith.constant 1.000000e+00 : f32
    %63 = vector.broadcast %cst_25 : f32 to vector<128x128xf32>
    %64 = arith.addf %63, %62 : vector<128x128xf32>
    %65 = arith.divf %63, %64 : vector<128x128xf32>
    %66 = arith.mulf %60, %65 : vector<128x128xf32>
    %c0_26 = arith.constant 0 : index
    %c0_27 = arith.constant 0 : index
    %67 = vector.load %arg8[%c0_26, %c0_27] : memref<128x128xf32, #tpu.memory_space<vmem>>, vector<128x128xf32>
    %cst_28 = arith.constant dense<0.000000e+00> : vector<128x128xf32>
    %68 = tpu.matmul %66, %67, %cst_28 {dimension_numbers = #tpu.dot_dimension_numbers<[1], [0], [0], [1], [0, 0, 1, 1], [], []>} : vector<128x128xf32>, vector<128x128xf32>, vector<128x128xf32> -> vector<128x128xf32>
    %cst_29 = arith.constant dense<0.000000e+00> : vector<128xf32>
    %69 = vector.multi_reduction <add>, %68, %cst_29 [1] : vector<128x128xf32> to vector<128xf32>
    %70 = vector.shape_cast %69 : vector<128xf32> to vector<128x1xf32>
    %cst_30 = arith.constant 1.280000e+02 : f32
    %71 = vector.broadcast %cst_30 : f32 to vector<128x1xf32>
    %72 = arith.divf %70, %71 : vector<128x1xf32>
    %73 = arith.mulf %68, %68 : vector<128x128xf32>
    %cst_31 = arith.constant dense<0.000000e+00> : vector<128xf32>
    %74 = vector.multi_reduction <add>, %73, %cst_31 [1] : vector<128x128xf32> to vector<128xf32>
    %75 = vector.shape_cast %74 : vector<128xf32> to vector<128x1xf32>
    %cst_32 = arith.constant 1.280000e+02 : f32
    %76 = vector.broadcast %cst_32 : f32 to vector<128x1xf32>
    %77 = arith.divf %75, %76 : vector<128x1xf32>
    %78 = arith.mulf %72, %72 : vector<128x1xf32>
    %79 = arith.subf %77, %78 : vector<128x1xf32>
    %c0_33 = arith.constant 0 : index
    %c0_34 = arith.constant 0 : index
    %80 = vector.load %arg9[%c0_33, %c0_34] : memref<1x128xf32, #tpu.memory_space<vmem>>, vector<1x128xf32>
    %cst_35 = arith.constant 1.000000e-03 : f32
    %81 = vector.broadcast %cst_35 : f32 to vector<128x1xf32>
    %82 = arith.addf %79, %81 : vector<128x1xf32>
    %83 = math.rsqrt %82 : vector<128x1xf32>
    %84 = vector.broadcast %80 : vector<1x128xf32> to vector<128x128xf32>
    %85 = vector.broadcast %83 : vector<128x1xf32> to vector<128x128xf32>
    %86 = arith.mulf %84, %85 : vector<128x128xf32>
    %c0_36 = arith.constant 0 : index
    %c0_37 = arith.constant 0 : index
    %87 = vector.load %arg10[%c0_36, %c0_37] : memref<1x128xf32, #tpu.memory_space<vmem>>, vector<1x128xf32>
    %88 = vector.broadcast %72 : vector<128x1xf32> to vector<128x128xf32>
    %89 = arith.mulf %88, %86 : vector<128x128xf32>
    %90 = vector.broadcast %87 : vector<1x128xf32> to vector<128x128xf32>
    %91 = arith.subf %90, %89 : vector<128x128xf32>
    %92 = arith.mulf %68, %86 : vector<128x128xf32>
    %93 = arith.addf %92, %91 : vector<128x128xf32>
    %94 = arith.negf %93 : vector<128x128xf32>
    %95 = math.exp %94 : vector<128x128xf32>
    %cst_38 = arith.constant 1.000000e+00 : f32
    %96 = vector.broadcast %cst_38 : f32 to vector<128x128xf32>
    %97 = arith.addf %96, %95 : vector<128x128xf32>
    %98 = arith.divf %96, %97 : vector<128x128xf32>
    %99 = arith.mulf %93, %98 : vector<128x128xf32>
    %c0_39 = arith.constant 0 : index
    %c0_40 = arith.constant 0 : index
    %100 = vector.load %arg11[%c0_39, %c0_40] : memref<128x128xf32, #tpu.memory_space<vmem>>, vector<128x128xf32>
    %cst_41 = arith.constant dense<0.000000e+00> : vector<128x128xf32>
    %101 = tpu.matmul %99, %100, %cst_41 {dimension_numbers = #tpu.dot_dimension_numbers<[1], [0], [0], [1], [0, 0, 1, 1], [], []>} : vector<128x128xf32>, vector<128x128xf32>, vector<128x128xf32> -> vector<128x128xf32>
    %c0_42 = arith.constant 0 : index
    %c0_43 = arith.constant 0 : index
    %102 = vector.load %arg12[%c0_42, %c0_43] : memref<1x128xf32, #tpu.memory_space<vmem>>, vector<1x128xf32>
    %103 = vector.broadcast %102 : vector<1x128xf32> to vector<128x128xf32>
    %104 = arith.addf %101, %103 : vector<128x128xf32>
    %105 = math.tanh %104 : vector<128x128xf32>
    %c0_44 = arith.constant 0 : index
    %c0_45 = arith.constant 0 : index
    %106 = vector.load %arg13[%c0_44, %c0_45] : memref<128x128xf32, #tpu.memory_space<vmem>>, vector<128x128xf32>
    tpu.vector_store %arg13[%c0_44, %c0_45], %105 {strides = array<i32>} : memref<128x128xf32, #tpu.memory_space<vmem>>, vector<128x128xf32>,
    return
  }
  func.func @transform_0(%arg0: i32) -> (i32, i32) {
    %c0_i32 = arith.constant 0 : i32
    %c0_i32_0 = arith.constant 0 : i32
    return %arg0, %c0_i32 : i32, i32
  }
  func.func @transform_1(%arg0: i32) -> (i32, i32) {
    %c0_i32 = arith.constant 0 : i32
    %c0_i32_0 = arith.constant 0 : i32
    %c0_i32_1 = arith.constant 0 : i32
    return %c0_i32, %c0_i32_0 : i32, i32
  }
  func.func @transform_2(%arg0: i32) -> (i32, i32) {
    %c0_i32 = arith.constant 0 : i32
    %c0_i32_0 = arith.constant 0 : i32
    %c0_i32_1 = arith.constant 0 : i32
    return %c0_i32, %c0_i32_0 : i32, i32
  }
  func.func @transform_3(%arg0: i32) -> (i32, i32) {
    %c0_i32 = arith.constant 0 : i32
    %c0_i32_0 = arith.constant 0 : i32
    %c0_i32_1 = arith.constant 0 : i32
    return %c0_i32, %c0_i32_0 : i32, i32
  }
  func.func @transform_4(%arg0: i32) -> (i32, i32) {
    %c0_i32 = arith.constant 0 : i32
    %c0_i32_0 = arith.constant 0 : i32
    %c0_i32_1 = arith.constant 0 : i32
    return %c0_i32, %c0_i32_0 : i32, i32
  }
  func.func @transform_5(%arg0: i32) -> (i32, i32) {
    %c0_i32 = arith.constant 0 : i32
    %c0_i32_0 = arith.constant 0 : i32
    %c0_i32_1 = arith.constant 0 : i32
    return %c0_i32, %c0_i32_0 : i32, i32
  }
  func.func @transform_6(%arg0: i32) -> (i32, i32) {
    %c0_i32 = arith.constant 0 : i32
    %c0_i32_0 = arith.constant 0 : i32
    %c0_i32_1 = arith.constant 0 : i32
    return %c0_i32, %c0_i32_0 : i32, i32
  }
  func.func @transform_7(%arg0: i32) -> (i32, i32) {
    %c0_i32 = arith.constant 0 : i32
    %c0_i32_0 = arith.constant 0 : i32
    %c0_i32_1 = arith.constant 0 : i32
    return %c0_i32, %c0_i32_0 : i32, i32
  }
  func.func @transform_8(%arg0: i32) -> (i32, i32) {
    %c0_i32 = arith.constant 0 : i32
    %c0_i32_0 = arith.constant 0 : i32
    %c0_i32_1 = arith.constant 0 : i32
    return %c0_i32, %c0_i32_0 : i32, i32
  }
  func.func @transform_9(%arg0: i32) -> (i32, i32) {
    %c0_i32 = arith.constant 0 : i32
    %c0_i32_0 = arith.constant 0 : i32
    %c0_i32_1 = arith.constant 0 : i32
    return %c0_i32, %c0_i32_0 : i32, i32
  }
  func.func @transform_10(%arg0: i32) -> (i32, i32) {
    %c0_i32 = arith.constant 0 : i32
    %c0_i32_0 = arith.constant 0 : i32
    %c0_i32_1 = arith.constant 0 : i32
    return %c0_i32, %c0_i32_0 : i32, i32
  }
  func.func @transform_11(%arg0: i32) -> (i32, i32) {
    %c0_i32 = arith.constant 0 : i32
    %c0_i32_0 = arith.constant 0 : i32
    %c0_i32_1 = arith.constant 0 : i32
    return %c0_i32, %c0_i32_0 : i32, i32
  }
  func.func @transform_12(%arg0: i32) -> (i32, i32) {
    %c0_i32 = arith.constant 0 : i32
    %c0_i32_0 = arith.constant 0 : i32
    return %arg0, %c0_i32 : i32, i32
  }
}

</mosaic_0001>

<llo_original>
// kernel: tpu_custom_call.1
$region0: #{tpu_custom_call.1}
  #allocation0 [shape = 'u32[]', space=smem, size = 0x4, offset = 0x4, fixed_abs, tag = 'smem constant byte address 0x4 - core index']
  #allocation1 [shape = 'u32[144,128]{1,0:T(1,128)}', space=vmem, size = 0x12000, scoped, tag = 'internal scratch']
  %s0 = inlined_call_operand.vmem [shape: f32[256,32], index: 0, kind: input, shape index: {}]
  %s1 = inlined_call_operand.vmem [shape: f32[32,128], index: 1, kind: input, shape index: {}]
  %s2 = inlined_call_operand.vmem [shape: f32[1,128], index: 2, kind: input, shape index: {}]
  %s3 = inlined_call_operand.vmem [shape: f32[1,128], index: 3, kind: input, shape index: {}]
  %s4 = inlined_call_operand.vmem [shape: f32[128,128], index: 4, kind: input, shape index: {}]
  %s5 = inlined_call_operand.vmem [shape: f32[1,128], index: 5, kind: input, shape index: {}]
  %s6 = inlined_call_operand.vmem [shape: f32[1,128], index: 6, kind: input, shape index: {}]
  %s7 = inlined_call_operand.vmem [shape: f32[128,128], index: 7, kind: input, shape index: {}]
  %s8 = inlined_call_operand.vmem [shape: f32[1,128], index: 8, kind: input, shape index: {}]
  %s9 = inlined_call_operand.vmem [shape: f32[1,128], index: 9, kind: input, shape index: {}]
  %s10 = inlined_call_operand.hbm [shape: f32[128,128], index: 10, kind: input, shape index: {}]
  %s11 = inlined_call_operand.vmem [shape: f32[1,128], index: 11, kind: input, shape index: {}]
  %s12 = inlined_call_operand.hbm [shape: f32[256,128], index: 12, kind: output, shape index: {}]
  %s13 = sld [smem:[#allocation0]]
  $region85: #{tpu_custom_call.1} parent=0
    _
  %s15 = ssub.s32 1, %s13
  %s16 = scalar_select 0, %s15, %s13
  $region1: #{tpu_custom_call.1} parent=0
    #allocation2 [shape = 'u8[65536]{0}', space=vmem, size = 0x10000, scoped, tag = 'input window, operand 10, single buffered']
    #allocation3 [shape = 's32[2]{0}', space=sflag, size = 0x8, scoped, tag = 'scoped memory for tpu_custom_call.1']
    #allocation4 [shape = 's32[2]{0}', space=sflag, size = 0x8, scoped, tag = 'scoped memory for tpu_custom_call.1']
    #allocation5 [shape = 'u8[131072]{0}', space=vmem, size = 0x20000, scoped, tag = 'output window, operand 0']
    %17 = vsyncpa [#allocation3], 0
    %18 = vsyncpa [#allocation4], 0
    %s19 = scalar_lea.sflag [#allocation4], 1
    %20 = vsyncpa %s19, 0
    loop: start=0, step=1, limit=4
    $region2: #{tpu_custom_call.1} parent=1 // loop_pre_header
      _
    $region3: #{tpu_custom_call.1} parent=1 // loop_header
      %s22 = sphi 0, %s26
      %p23 = scmp.ge.s32.totalorder %s22, 4
      %s32 = sphi 0, %s34
      %s35 = sphi 0, %s32
      %s36 = sphi 0, %s35
      %s52 = sphi 0, %s36
      %s56 = sphi 0, %s56
      %s58 = sphi 0, %s56
      %s59 = sphi 0, %s58
      %s73 = sphi 0, %s59
      %s77 = sphi 0, %s77
      %s79 = sphi 0, %s77
      %s80 = sphi 0, %s79
      %s94 = sphi 0, %s80
      %s98 = sphi 0, %s98
      %s100 = sphi 0, %s98
      %s101 = sphi 0, %s100
      %s115 = sphi 0, %s101
      %s119 = sphi 0, %s119
      %s121 = sphi 0, %s119
      %s122 = sphi 0, %s121
      %s136 = sphi 0, %s122
      %s140 = sphi 0, %s140
      %s142 = sphi 0, %s140
      %s143 = sphi 0, %s142
      %s157 = sphi 0, %s143
      %s161 = sphi 0, %s161
      %s163 = sphi 0, %s161
      %s164 = sphi 0, %s163
      %s178 = sphi 0, %s164
      %s182 = sphi 0, %s182
      %s184 = sphi 0, %s182
      %s185 = sphi 0, %s184
      %s199 = sphi 0, %s185
      %s203 = sphi 0, %s203
      %s205 = sphi 0, %s203
      %s206 = sphi 0, %s205
      %s220 = sphi 0, %s206
      %s224 = sphi 0, %s224
      %s226 = sphi 0, %s224
      %s227 = sphi 0, %s226
      %s241 = sphi 0, %s227
      %s245 = sphi 0, %s245
      %s247 = sphi 0, %s245
      %s248 = sphi 0, %s247
      %s262 = sphi 0, %s248
      %s266 = sphi 0, %s266
      %s268 = sphi 0, %s266
      %s269 = sphi 0, %s268
      %s283 = sphi 0, %s269
      %s289 = sphi 0, %s291
      %s292 = sphi 0, %s289
      %s293 = sphi 0, %s292
      %s309 = sphi 0, %s293
    $region4: #{tpu_custom_call.1} parent=1 // loop_header_branch
      %25 = sbr.rel (%p23) target = $region8
    $region5: #{tpu_custom_call.1} parent=1 // loop_body
      %s27 = ssub.s32 %s22, 1
      %s28 = ssub.s32 %s22, 2
      %s29 = sadd.s32 %s22, 1
      %s30 = ssub.s32 %s22, %s29
      %p31 = scmp.eq.s32.totalorder %s30, 0
      %s33 = sadd.s32 %s32, 1
      %s34 = scalar_select %p31, %s32, %s33
      %p37 = pneg %p31
      %p38 = scmp.eq.s32.totalorder %s22, 1
      %p39 = por %p37, %p38
      %p40 = scmp.ne.s32.totalorder %s32, %s35
      %p41 = scmp.eq.s32.totalorder %s22, 0
      %p42 = por %p40, %p41
      %p43 = scmp.ne.s32.totalorder %s32, %s35
      %p44 = scmp.eq.s32.totalorder %s27, 1
      %p45 = por %p43, %p44
      %p46 = scmp.ne.s32.totalorder %s35, %s36
      %p47 = scmp.eq.s32.totalorder %s27, 0
      %p48 = por %p46, %p47
      %p49 = scmp.ne.s32.totalorder %s35, %s36
      %p50 = scmp.eq.s32.totalorder %s28, 1
      %p51 = por %p49, %p50
      %p53 = scmp.ne.s32.totalorder %s36, %s52
      %p54 = scmp.eq.s32.totalorder %s28, 0
      %p55 = por %p53, %p54
      %s57 = sadd.s32 %s56, 1
      %p60 = scmp.eq.s32.totalorder %s22, 1
      %p61 = scmp.ne.s32.totalorder %s56, %s58
      %p62 = scmp.eq.s32.totalorder %s22, 0
      %p63 = por %p61, %p62
      %p64 = scmp.ne.s32.totalorder %s56, %s58
      %p65 = scmp.eq.s32.totalorder %s27, 1
      %p66 = por %p64, %p65
      %p67 = scmp.ne.s32.totalorder %s58, %s59
      %p68 = scmp.eq.s32.totalorder %s27, 0
      %p69 = por %p67, %p68
      %p70 = scmp.ne.s32.totalorder %s58, %s59
      %p71 = scmp.eq.s32.totalorder %s28, 1
      %p72 = por %p70, %p71
      %p74 = scmp.ne.s32.totalorder %s59, %s73
      %p75 = scmp.eq.s32.totalorder %s28, 0
      %p76 = por %p74, %p75
      %s78 = sadd.s32 %s77, 1
      %p81 = scmp.eq.s32.totalorder %s22, 1
      %p82 = scmp.ne.s32.totalorder %s77, %s79
      %p83 = scmp.eq.s32.totalorder %s22, 0
      %p84 = por %p82, %p83
      %p85 = scmp.ne.s32.totalorder %s77, %s79
      %p86 = scmp.eq.s32.totalorder %s27, 1
      %p87 = por %p85, %p86
      %p88 = scmp.ne.s32.totalorder %s79, %s80
      %p89 = scmp.eq.s32.totalorder %s27, 0
      %p90 = por %p88, %p89
      %p91 = scmp.ne.s32.totalorder %s79, %s80
      %p92 = scmp.eq.s32.totalorder %s28, 1
      %p93 = por %p91, %p92
      %p95 = scmp.ne.s32.totalorder %s80, %s94
      %p96 = scmp.eq.s32.totalorder %s28, 0
      %p97 = por %p95, %p96
      %s99 = sadd.s32 %s98, 1
      %p102 = scmp.eq.s32.totalorder %s22, 1
      %p103 = scmp.ne.s32.totalorder %s98, %s100
      %p104 = scmp.eq.s32.totalorder %s22, 0
      %p105 = por %p103, %p104
      %p106 = scmp.ne.s32.totalorder %s98, %s100
      %p107 = scmp.eq.s32.totalorder %s27, 1
      %p108 = por %p106, %p107
      %p109 = scmp.ne.s32.totalorder %s100, %s101
      %p110 = scmp.eq.s32.totalorder %s27, 0
      %p111 = por %p109, %p110
      %p112 = scmp.ne.s32.totalorder %s100, %s101
      %p113 = scmp.eq.s32.totalorder %s28, 1
      %p114 = por %p112, %p113
      %p116 = scmp.ne.s32.totalorder %s101, %s115
      %p117 = scmp.eq.s32.totalorder %s28, 0
      %p118 = por %p116, %p117
      %s120 = sadd.s32 %s119, 1
      %p123 = scmp.eq.s32.totalorder %s22, 1
      %p124 = scmp.ne.s32.totalorder %s119, %s121
      %p125 = scmp.eq.s32.totalorder %s22, 0
      %p126 = por %p124, %p125
      %p127 = scmp.ne.s32.totalorder %s119, %s121
      %p128 = scmp.eq.s32.totalorder %s27, 1
      %p129 = por %p127, %p128
      %p130 = scmp.ne.s32.totalorder %s121, %s122
      %p131 = scmp.eq.s32.totalorder %s27, 0
      %p132 = por %p130, %p131
      %p133 = scmp.ne.s32.totalorder %s121, %s122
      %p134 = scmp.eq.s32.totalorder %s28, 1
      %p135 = por %p133, %p134
      %p137 = scmp.ne.s32.totalorder %s122, %s136
      %p138 = scmp.eq.s32.totalorder %s28, 0
      %p139 = por %p137, %p138
      %s141 = sadd.s32 %s140, 1
      %p144 = scmp.eq.s32.totalorder %s22, 1
      %p145 = scmp.ne.s32.totalorder %s140, %s142
      %p146 = scmp.eq.s32.totalorder %s22, 0
      %p147 = por %p145, %p146
      %p148 = scmp.ne.s32.totalorder %s140, %s142
      %p149 = scmp.eq.s32.totalorder %s27, 1
      %p150 = por %p148, %p149
      %p151 = scmp.ne.s32.totalorder %s142, %s143
      %p152 = scmp.eq.s32.totalorder %s27, 0
      %p153 = por %p151, %p152
      %p154 = scmp.ne.s32.totalorder %s142, %s143
      %p155 = scmp.eq.s32.totalorder %s28, 1
      %p156 = por %p154, %p155
      %p158 = scmp.ne.s32.totalorder %s143, %s157
      %p159 = scmp.eq.s32.totalorder %s28, 0
      %p160 = por %p158, %p159
      %s162 = sadd.s32 %s161, 1
      %p165 = scmp.eq.s32.totalorder %s22, 1
      %p166 = scmp.ne.s32.totalorder %s161, %s163
      %p167 = scmp.eq.s32.totalorder %s22, 0
      %p168 = por %p166, %p167
      %p169 = scmp.ne.s32.totalorder %s161, %s163
      %p170 = scmp.eq.s32.totalorder %s27, 1
      %p171 = por %p169, %p170
      %p172 = scmp.ne.s32.totalorder %s163, %s164
      %p173 = scmp.eq.s32.totalorder %s27, 0
      %p174 = por %p172, %p173
      %p175 = scmp.ne.s32.totalorder %s163, %s164
      %p176 = scmp.eq.s32.totalorder %s28, 1
      %p177 = por %p175, %p176
      %p179 = scmp.ne.s32.totalorder %s164, %s178
      %p180 = scmp.eq.s32.totalorder %s28, 0
      %p181 = por %p179, %p180
      %s183 = sadd.s32 %s182, 1
      %p186 = scmp.eq.s32.totalorder %s22, 1
      %p187 = scmp.ne.s32.totalorder %s182, %s184
      %p188 = scmp.eq.s32.totalorder %s22, 0
      %p189 = por %p187, %p188
      %p190 = scmp.ne.s32.totalorder %s182, %s184
      %p191 = scmp.eq.s32.totalorder %s27, 1
      %p192 = por %p190, %p191
      %p193 = scmp.ne.s32.totalorder %s184, %s185
      %p194 = scmp.eq.s32.totalorder %s27, 0
      %p195 = por %p193, %p194
      %p196 = scmp.ne.s32.totalorder %s184, %s185
      %p197 = scmp.eq.s32.totalorder %s28, 1
      %p198 = por %p196, %p197
      %p200 = scmp.ne.s32.totalorder %s185, %s199
      %p201 = scmp.eq.s32.totalorder %s28, 0
      %p202 = por %p200, %p201
      %s204 = sadd.s32 %s203, 1
      %p207 = scmp.eq.s32.totalorder %s22, 1
      %p208 = scmp.ne.s32.totalorder %s203, %s205
      %p209 = scmp.eq.s32.totalorder %s22, 0
      %p210 = por %p208, %p209
      %p211 = scmp.ne.s32.totalorder %s203, %s205
      %p212 = scmp.eq.s32.totalorder %s27, 1
      %p213 = por %p211, %p212
      %p214 = scmp.ne.s32.totalorder %s205, %s206
      %p215 = scmp.eq.s32.totalorder %s27, 0
      %p216 = por %p214, %p215
      %p217 = scmp.ne.s32.totalorder %s205, %s206
      %p218 = scmp.eq.s32.totalorder %s28, 1
      %p219 = por %p217, %p218
      %p221 = scmp.ne.s32.totalorder %s206, %s220
      %p222 = scmp.eq.s32.totalorder %s28, 0
      %p223 = por %p221, %p222
      %s225 = sadd.s32 %s224, 1
      %p228 = scmp.eq.s32.totalorder %s22, 1
      %p229 = scmp.ne.s32.totalorder %s224, %s226
      %p230 = scmp.eq.s32.totalorder %s22, 0
      %p231 = por %p229, %p230
      %p232 = scmp.ne.s32.totalorder %s224, %s226
      %p233 = scmp.eq.s32.totalorder %s27, 1
      %p234 = por %p232, %p233
      %p235 = scmp.ne.s32.totalorder %s226, %s227
      %p236 = scmp.eq.s32.totalorder %s27, 0
      %p237 = por %p235, %p236
      %p238 = scmp.ne.s32.totalorder %s226, %s227
      %p239 = scmp.eq.s32.totalorder %s28, 1
      %p240 = por %p238, %p239
      %p242 = scmp.ne.s32.totalorder %s227, %s241
      %p243 = scmp.eq.s32.totalorder %s28, 0
      %p244 = por %p242, %p243
      %s246 = sadd.s32 %s245, 1
      %p249 = scmp.eq.s32.totalorder %s22, 1
      %p250 = scmp.ne.s32.totalorder %s245, %s247
      %p251 = scmp.eq.s32.totalorder %s22, 0
      %p252 = por %p250, %p251
      %p253 = scmp.ne.s32.totalorder %s245, %s247
      %p254 = scmp.eq.s32.totalorder %s27, 1
      %p255 = por %p253, %p254
      %p256 = scmp.ne.s32.totalorder %s247, %s248
      %p257 = scmp.eq.s32.totalorder %s27, 0
      %p258 = por %p256, %p257
      %p259 = scmp.ne.s32.totalorder %s247, %s248
      %p260 = scmp.eq.s32.totalorder %s28, 1
      %p261 = por %p259, %p260
      %p263 = scmp.ne.s32.totalorder %s248, %s262
      %p264 = scmp.eq.s32.totalorder %s28, 0
      %p265 = por %p263, %p264
      %s267 = sadd.s32 %s266, 1
      %p270 = scmp.eq.s32.totalorder %s22, 1
      %p271 = scmp.ne.s32.totalorder %s266, %s268
      %p272 = scmp.eq.s32.totalorder %s22, 0
      %p273 = por %p271, %p272
      %p274 = scmp.ne.s32.totalorder %s266, %s268
      %p275 = scmp.eq.s32.totalorder %s27, 1
      %p276 = por %p274, %p275
      %p277 = scmp.ne.s32.totalorder %s268, %s269
      %p278 = scmp.eq.s32.totalorder %s27, 0
      %p279 = por %p277, %p278
      %p280 = scmp.ne.s32.totalorder %s268, %s269
      %p281 = scmp.eq.s32.totalorder %s28, 1
      %p282 = por %p280, %p281
      %p284 = scmp.ne.s32.totalorder %s269, %s283
      %p285 = scmp.eq.s32.totalorder %s28, 0
      %p286 = por %p284, %p285
      %s287 = ssub.s32 %s22, %s29
      %p288 = scmp.eq.s32.totalorder %s287, 0
      %s290 = sadd.s32 %s289, 1
      %s291 = scalar_select %p288, %s289, %s290
      %p294 = pneg %p288
      %p295 = scmp.eq.s32.totalorder %s22, 1
      %p296 = por %p294, %p295
      %p297 = scmp.ne.s32.totalorder %s289, %s292
      %p298 = scmp.eq.s32.totalorder %s22, 0
      %p299 = por %p297, %p298
      %p300 = scmp.ne.s32.totalorder %s289, %s292
      %p301 = scmp.eq.s32.totalorder %s27, 1
      %p302 = por %p300, %p301
      %p303 = scmp.ne.s32.totalorder %s292, %s293
      %p304 = scmp.eq.s32.totalorder %s27, 0
      %p305 = por %p303, %p304
      %p306 = scmp.ne.s32.totalorder %s292, %s293
      %p307 = scmp.eq.s32.totalorder %s28, 1
      %p308 = por %p306, %p307
      %p310 = scmp.ne.s32.totalorder %s293, %s309
      %p311 = scmp.eq.s32.totalorder %s28, 0
      %p312 = por %p310, %p311
      %p313 = scmp.le.s32.totalorder 1, %s22
      %p314 = scmp.lt.s32.totalorder %s22, 3
      %p315 = pnand %p313, %p314
      %p316 = pneg %p315
      // Predicated region
      $region9: #{tpu_custom_call.1} parent=5 // pred_check
        _
      $region10: #{tpu_custom_call.1} parent=5 // pred_check_branch
        %318 = sbr.rel (%p315) target = $region12
      $region11: #{tpu_custom_call.1} parent=5 // pred_region
        %s319 = ssub.s32 %s22, 1
        // Predicated region
        $region13: #{tpu_custom_call.1} parent=11 // pred_check
          %p320 = pneg %p69
        $region14: #{tpu_custom_call.1} parent=11 // pred_check_branch
          %322 = sbr.rel (%p320) target = $region16
        $region15: #{tpu_custom_call.1} parent=11 // pred_region
          _
        $region16: #{tpu_custom_call.1} parent=11 // pred_fallthru
          _
        // Predicated region
        $region17: #{tpu_custom_call.1} parent=11 // pred_check
          %p323 = pneg %p90
        $region18: #{tpu_custom_call.1} parent=11 // pred_check_branch
          %325 = sbr.rel (%p323) target = $region20
        $region19: #{tpu_custom_call.1} parent=11 // pred_region
          _
        $region20: #{tpu_custom_call.1} parent=11 // pred_fallthru
          _
        // Predicated region
        $region21: #{tpu_custom_call.1} parent=11 // pred_check
          %p326 = pneg %p111
        $region22: #{tpu_custom_call.1} parent=11 // pred_check_branch
          %328 = sbr.rel (%p326) target = $region24
        $region23: #{tpu_custom_call.1} parent=11 // pred_region
          _
        $region24: #{tpu_custom_call.1} parent=11 // pred_fallthru
          _
        // Predicated region
        $region25: #{tpu_custom_call.1} parent=11 // pred_check
          %p329 = pneg %p132
        $region26: #{tpu_custom_call.1} parent=11 // pred_check_branch
          %331 = sbr.rel (%p329) target = $region28
        $region27: #{tpu_custom_call.1} parent=11 // pred_region
          _
        $region28: #{tpu_custom_call.1} parent=11 // pred_fallthru
          _
        // Predicated region
        $region29: #{tpu_custom_call.1} parent=11 // pred_check
          %p332 = pneg %p153
        $region30: #{tpu_custom_call.1} parent=11 // pred_check_branch
          %334 = sbr.rel (%p332) target = $region32
        $region31: #{tpu_custom_call.1} parent=11 // pred_region
          _
        $region32: #{tpu_custom_call.1} parent=11 // pred_fallthru
          _
        // Predicated region
        $region33: #{tpu_custom_call.1} parent=11 // pred_check
          %p335 = pneg %p174
        $region34: #{tpu_custom_call.1} parent=11 // pred_check_branch
          %337 = sbr.rel (%p335) target = $region36
        $region35: #{tpu_custom_call.1} parent=11 // pred_region
          _
        $region36: #{tpu_custom_call.1} parent=11 // pred_fallthru
          _
        // Predicated region
        $region37: #{tpu_custom_call.1} parent=11 // pred_check
          %p338 = pneg %p195
        $region38: #{tpu_custom_call.1} parent=11 // pred_check_branch
          %340 = sbr.rel (%p338) target = $region40
        $region39: #{tpu_custom_call.1} parent=11 // pred_region
          _
        $region40: #{tpu_custom_call.1} parent=11 // pred_fallthru
          _
        // Predicated region
        $region41: #{tpu_custom_call.1} parent=11 // pred_check
          %p341 = pneg %p216
        $region42: #{tpu_custom_call.1} parent=11 // pred_check_branch
          %343 = sbr.rel (%p341) target = $region44
        $region43: #{tpu_custom_call.1} parent=11 // pred_region
          _
        $region44: #{tpu_custom_call.1} parent=11 // pred_fallthru
          _
        // Predicated region
        $region45: #{tpu_custom_call.1} parent=11 // pred_check
          %p344 = pneg %p237
        $region46: #{tpu_custom_call.1} parent=11 // pred_check_branch
          %346 = sbr.rel (%p344) target = $region48
        $region47: #{tpu_custom_call.1} parent=11 // pred_region
          _
        $region48: #{tpu_custom_call.1} parent=11 // pred_fallthru
          _
        // Predicated region
        $region49: #{tpu_custom_call.1} parent=11 // pred_check
          %p347 = pneg %p258
        $region50: #{tpu_custom_call.1} parent=11 // pred_check_branch
          %349 = sbr.rel (%p347) target = $region52
        $region51: #{tpu_custom_call.1} parent=11 // pred_region
          %s351 = ssub.s32 2048, 2048
          %352 = vsyncadd [#allocation3], %s351
          %s353 = sshll.u32 [#allocation2], 4
          %s354 = int_to_ptr.vmem [resolvable:$true] %s353
          %359 = dma.hbm_to_vmem [thread:$0]  %s10, 2048, %s354, [#allocation3], 128, 128, 8
        $region52: #{tpu_custom_call.1} parent=11 // pred_fallthru
          _
        // Predicated region
        $region53: #{tpu_custom_call.1} parent=11 // pred_check
          %p360 = pneg %p279
        $region54: #{tpu_custom_call.1} parent=11 // pred_check_branch
          %362 = sbr.rel (%p360) target = $region56
        $region55: #{tpu_custom_call.1} parent=11 // pred_region
          _
        $region56: #{tpu_custom_call.1} parent=11 // pred_fallthru
          _
      $region12: #{tpu_custom_call.1} parent=5 // pred_fallthru
        _
      %p363 = scmp.lt.s32.totalorder %s22, 2
      // Predicated region
      $region57: #{tpu_custom_call.1} parent=5 // pred_check
        %p364 = pneg %p363
      $region58: #{tpu_custom_call.1} parent=5 // pred_check_branch
        %366 = sbr.rel (%p364) target = $region60
      $region59: #{tpu_custom_call.1} parent=5 // pred_region
        // Predicated region
        $region61: #{tpu_custom_call.1} parent=59 // pred_check
          %p367 = pneg %p42
        $region62: #{tpu_custom_call.1} parent=59 // pred_check_branch
          %369 = sbr.rel (%p367) target = $region64
        $region63: #{tpu_custom_call.1} parent=59 // pred_region
          %s370 = smul.u32 16, %s22
          %p371 = scmp.lt.s32.totalorder %s370, 31
          %s372 = scalar_select %p371, %s370, 31
          %s373 = smul.addr %s372, 8
          %s374 = scalar_lea.vmem %s0, %s373
          %s375 = smul.u32 16, %s22
        $region64: #{tpu_custom_call.1} parent=59 // pred_fallthru
          _
      $region60: #{tpu_custom_call.1} parent=5 // pred_fallthru
        _
      %p376 = scmp.le.s32.totalorder 1, %s22
      %p377 = scmp.lt.s32.totalorder %s22, 3
      %p378 = pnand %p376, %p377
      %p379 = pneg %p378
      // Predicated region
      $region65: #{tpu_custom_call.1} parent=5 // pred_check
        _
      $region66: #{tpu_custom_call.1} parent=5 // pred_check_branch
        %381 = sbr.rel (%p378) target = $region68
      $region67: #{tpu_custom_call.1} parent=5 // pred_region
        %s382 = ssub.s32 %s22, 1
        // Predicated region
        $region69: #{tpu_custom_call.1} parent=67 // pred_check
          %p383 = pneg %p258
        $region70: #{tpu_custom_call.1} parent=67 // pred_check_branch
          %385 = sbr.rel (%p383) target = $region72
        $region71: #{tpu_custom_call.1} parent=67 // pred_region
          %386 = dma.done [#allocation3], 2048
        $region72: #{tpu_custom_call.1} parent=67 // pred_fallthru
          _
        %s387 = smul.u32 16, %s27
        %p388 = scmp.lt.s32.totalorder %s387, 31
        %s389 = scalar_select %p388, %s387, 31
        %s390 = smul.addr %s389, 8
        %s391 = scalar_lea.vmem %s0, %s390
        %p392 = pneg %p48
        %p393 = pneg %p45
        %p394 = pneg %p69
        %p395 = pneg %p66
        %p396 = pneg %p90
        %p397 = pneg %p87
        %p398 = pneg %p111
        %p399 = pneg %p108
        %p400 = pneg %p132
        %p401 = pneg %p129
        %p402 = pneg %p153
        %p403 = pneg %p150
        %p404 = pneg %p174
        %p405 = pneg %p171
        %p406 = pneg %p195
        %p407 = pneg %p192
        %p408 = pneg %p216
        %p409 = pneg %p213
        %p410 = pneg %p237
        %p411 = pneg %p234
        %p412 = pneg %p258
        %p413 = pneg %p255
        %p414 = pneg %p279
        %p415 = pneg %p276
        %p416 = pneg %p305
        %p417 = pneg %p302
        %s418 = sand.u32 %s292, 1
        %s419 = scalar_lea.sflag [#allocation4], %s418
        %s420 = sand.u32 %s292, 1
        %s421 = smul.addr %s420, 128
        %s422 = scalar_lea.vmem [#allocation5], %s421
        %s423 = smul.u32 16, %s27
        %p424 = scmp.lt.s32.totalorder %s423, 31
        %s425 = scalar_select %p424, %s423, 31
        %s426 = smul.addr %s425, 8
        %s427 = scalar_lea.vmem %s0, %s426
        %s428 = smul.u32 16, %s27
        %s429 = smul.u32 16, %s27
        %v430 = vld [vmem:[%s427] sm:$0xff]
        %v431 = vld [vmem:[%s427 + $0x8] sm:$0xff]
        %v432 = vld [vmem:[%s427 + $0x10] sm:$0xff]
        %v433 = vld [vmem:[%s427 + $0x18] sm:$0xff]
        %v434 = vld [vmem:[%s427 + $0x20] sm:$0xff]
        %v435 = vld [vmem:[%s427 + $0x28] sm:$0xff]
        %v436 = vld [vmem:[%s427 + $0x30] sm:$0xff]
        %v437 = vld [vmem:[%s427 + $0x38] sm:$0xff]
        %v438 = vld [vmem:[%s427 + $0x40] sm:$0xff]
        %v439 = vld [vmem:[%s427 + $0x48] sm:$0xff]
        %v440 = vld [vmem:[%s427 + $0x50] sm:$0xff]
        %v441 = vld [vmem:[%s427 + $0x58] sm:$0xff]
        %v442 = vld [vmem:[%s427 + $0x60] sm:$0xff]
        %v443 = vld [vmem:[%s427 + $0x68] sm:$0xff]
        %v444 = vld [vmem:[%s427 + $0x70] sm:$0xff]
        %v445 = vld [vmem:[%s427 + $0x78] sm:$0xff]
        %v446 = vld [vmem:[%s1] sm:$0xff]
        %v447 = vld [vmem:[%s1 + $0x8] sm:$0xff]
        %v448 = vld [vmem:[%s1 + $0x10] sm:$0xff]
        %v449 = vld [vmem:[%s1 + $0x18] sm:$0xff]
        %vm450 = vcmask 261120
        %v452 = vsel %vm450, %v430, 0
        %v455 = vsel %vm450, %v431, 0
        %v458 = vsel %vm450, %v432, 0
        %v461 = vsel %vm450, %v433, 0
        %v464 = vsel %vm450, %v434, 0
        %v467 = vsel %vm450, %v435, 0
        %v470 = vsel %vm450, %v436, 0
        %v473 = vsel %vm450, %v437, 0
        %v476 = vsel %vm450, %v438, 0
        %v479 = vsel %vm450, %v439, 0
        %v482 = vsel %vm450, %v440, 0
        %v485 = vsel %vm450, %v441, 0
        %v488 = vsel %vm450, %v442, 0
        %v491 = vsel %vm450, %v443, 0
        %v494 = vsel %vm450, %v444, 0
        %v497 = vsel %vm450, %v445, 0
        %499 = vmatprep.subr.mxu0 0.0
        %500 = vmatpush1.msra.mxu0 %v446
        %501 = vmatprep.subr.mxu0 0.0
        %502 = vmatpush1.msra.mxu0 %v447
        %503 = vmatprep.subr.mxu0 0.0
        %504 = vmatpush1.msra.mxu0 %v448
        %505 = vmatprep.subr.mxu0 0.0
        %506 = vmatpush1.msra.mxu0 %v449
        %507 = vmatprep.subr.mxu0 0.0
        %508 = vmatpush1.msra.mxu0 0.0
        %509 = vmatprep.subr.mxu0 0.0
        %510 = vmatpush1.msra.mxu0 0.0
        %511 = vmatprep.subr.mxu0 0.0
        %512 = vmatpush1.msra.mxu0 0.0
        %513 = vmatprep.subr.mxu0 0.0
        %514 = vmatpush1.msra.mxu0 0.0
        %515 = vmatprep.subr.mxu0 0.0
        %516 = vmatpush1.msra.mxu0 0.0
        %517 = vmatprep.subr.mxu0 0.0
        %518 = vmatpush1.msra.mxu0 0.0
        %519 = vmatprep.subr.mxu0 0.0
        %520 = vmatpush1.msra.mxu0 0.0
        %521 = vmatprep.subr.mxu0 0.0
        %522 = vmatpush1.msra.mxu0 0.0
        %523 = vmatprep.subr.mxu0 0.0
        %524 = vmatpush1.msra.mxu0 0.0
        %525 = vmatprep.subr.mxu0 0.0
        %526 = vmatpush1.msra.mxu0 0.0
        %527 = vmatprep.subr.mxu0 0.0
        %528 = vmatpush1.msra.mxu0 0.0
        %529 = vmatprep.subr.mxu0 0.0
        %530 = vmatpush1.msra.mxu0 0.0
        %531 = vmatprep.subr.mxu0 0.0
        %532 = vmatpush1.msra.mxu0 0.0
        %533 = vmatprep.subr.mxu0 0.0
        %534 = vmatpush1.msra.mxu0 0.0
        %535 = vmatprep.subr.mxu0 0.0
        %536 = vmatpush1.msra.mxu0 0.0
        %537 = vmatprep.subr.mxu0 0.0
        %538 = vmatpush1.msra.mxu0 0.0
        %539 = vmatprep.subr.mxu0 0.0
        %540 = vmatpush1.msra.mxu0 0.0
        %541 = vmatprep.subr.mxu0 0.0
        %542 = vmatpush1.msra.mxu0 0.0
        %543 = vmatprep.subr.mxu0 0.0
        %544 = vmatpush1.msra.mxu0 0.0
        %545 = vmatprep.subr.mxu0 0.0
        %546 = vmatpush1.msra.mxu0 0.0
        %547 = vmatprep.subr.mxu0 0.0
        %548 = vmatpush1.msra.mxu0 0.0
        %549 = vmatprep.subr.mxu0 0.0
        %550 = vmatpush1.msra.mxu0 0.0
        %551 = vmatprep.subr.mxu0 0.0
        %552 = vmatpush1.msra.mxu0 0.0
        %553 = vmatprep.subr.mxu0 0.0
        %554 = vmatpush1.msra.mxu0 0.0
        %555 = vmatprep.subr.mxu0 0.0
        %556 = vmatpush1.msra.mxu0 0.0
        %557 = vmatprep.subr.mxu0 0.0
        %558 = vmatpush1.msra.mxu0 0.0
        %559 = vmatprep.subr.mxu0 0.0
        %560 = vmatpush1.msra.mxu0 0.0
        %561 = vmatprep.subr.mxu0 0.0
        %562 = vmatpush1.msra.mxu0 0.0
        %563 = vmatprep.mubr.f32.mxu0 0.0
        %564 = vmatmul.mubr.f32.gmra.mrb[0].mxu0 %v452
        %v565 = vpop.f32.mrb[0].mxu0
        %v566 = vadd.f32 0.0, %v565
        %v567 = vpop.f32.mrb[0].mxu0
        %568 = vmatprep.mubr.f32.mxu0 0.0
        %569 = vmatmul.mubr.f32.gmra.mrb[0].mxu0 %v455
        %v570 = vpop.f32.mrb[0].mxu0
        %v571 = vadd.f32 0.0, %v570
        %v572 = vpop.f32.mrb[0].mxu0
        %573 = vmatprep.mubr.f32.mxu0 0.0
        %574 = vmatmul.mubr.f32.gmra.mrb[0].mxu0 %v458
        %v575 = vpop.f32.mrb[0].mxu0
        %v576 = vadd.f32 0.0, %v575
        %v577 = vpop.f32.mrb[0].mxu0
        %578 = vmatprep.mubr.f32.mxu0 0.0
        %579 = vmatmul.mubr.f32.gmra.mrb[0].mxu0 %v461
        %v580 = vpop.f32.mrb[0].mxu0
        %v581 = vadd.f32 0.0, %v580
        %v582 = vpop.f32.mrb[0].mxu0
        %583 = vmatprep.mubr.f32.mxu0 0.0
        %584 = vmatmul.mubr.f32.gmra.mrb[0].mxu0 %v464
        %v585 = vpop.f32.mrb[0].mxu0
        %v586 = vadd.f32 0.0, %v585
        %v587 = vpop.f32.mrb[0].mxu0
        %588 = vmatprep.mubr.f32.mxu0 0.0
        %589 = vmatmul.mubr.f32.gmra.mrb[0].mxu0 %v467
        %v590 = vpop.f32.mrb[0].mxu0
        %v591 = vadd.f32 0.0, %v590
        %v592 = vpop.f32.mrb[0].mxu0
        %593 = vmatprep.mubr.f32.mxu0 0.0
        %594 = vmatmul.mubr.f32.gmra.mrb[0].mxu0 %v470
        %v595 = vpop.f32.mrb[0].mxu0
        %v596 = vadd.f32 0.0, %v595
        %v597 = vpop.f32.mrb[0].mxu0
        %598 = vmatprep.mubr.f32.mxu0 0.0
        %599 = vmatmul.mubr.f32.gmra.mrb[0].mxu0 %v473
        %v600 = vpop.f32.mrb[0].mxu0
        %v601 = vadd.f32 0.0, %v600
        %v602 = vpop.f32.mrb[0].mxu0
        %603 = vmatprep.mubr.f32.mxu0 0.0
        %604 = vmatmul.mubr.f32.gmra.mrb[0].mxu0 %v476
        %v605 = vpop.f32.mrb[0].mxu0
        %v606 = vadd.f32 0.0, %v605
        %v607 = vpop.f32.mrb[0].mxu0
        %608 = vmatprep.mubr.f32.mxu0 0.0
        %609 = vmatmul.mubr.f32.gmra.mrb[0].mxu0 %v479
        %v610 = vpop.f32.mrb[0].mxu0
        %v611 = vadd.f32 0.0, %v610
        %v612 = vpop.f32.mrb[0].mxu0
        %613 = vmatprep.mubr.f32.mxu0 0.0
        %614 = vmatmul.mubr.f32.gmra.mrb[0].mxu0 %v482
        %v615 = vpop.f32.mrb[0].mxu0
        %v616 = vadd.f32 0.0, %v615
        %v617 = vpop.f32.mrb[0].mxu0
        %618 = vmatprep.mubr.f32.mxu0 0.0
        %619 = vmatmul.mubr.f32.gmra.mrb[0].mxu0 %v485
        %v620 = vpop.f32.mrb[0].mxu0
        %v621 = vadd.f32 0.0, %v620
        %v622 = vpop.f32.mrb[0].mxu0
        %623 = vmatprep.mubr.f32.mxu0 0.0
        %624 = vmatmul.mubr.f32.gmra.mrb[0].mxu0 %v488
        %v625 = vpop.f32.mrb[0].mxu0
        %v626 = vadd.f32 0.0, %v625
        %v627 = vpop.f32.mrb[0].mxu0
        %628 = vmatprep.mubr.f32.mxu0 0.0
        %629 = vmatmul.mubr.f32.gmra.mrb[0].mxu0 %v491
        %v630 = vpop.f32.mrb[0].mxu0
        %v631 = vadd.f32 0.0, %v630
        %v632 = vpop.f32.mrb[0].mxu0
        %633 = vmatprep.mubr.f32.mxu0 0.0
        %634 = vmatmul.mubr.f32.gmra.mrb[0].mxu0 %v494
        %v635 = vpop.f32.mrb[0].mxu0
        %v636 = vadd.f32 0.0, %v635
        %v637 = vpop.f32.mrb[0].mxu0
        %638 = vmatprep.mubr.f32.mxu0 0.0
        %639 = vmatmul.mubr.f32.gmra.mrb[0].mxu0 %v497
        %v640 = vpop.f32.mrb[0].mxu0
        %v641 = vadd.f32 0.0, %v640
        %v642 = vpop.f32.mrb[0].mxu0
        %643 = vdwg.mxu0
        %644 = vadd.xlane.f32.xlu0 %v566
        %v645 = vpop.xlane.xlu0 %644
        %646 = vadd.xlane.f32.xlu0 %v571
        %v647 = vpop.xlane.xlu0 %646
        %648 = vadd.xlane.f32.xlu0 %v576
        %v649 = vpop.xlane.xlu0 %648
        %650 = vadd.xlane.f32.xlu0 %v581
        %v651 = vpop.xlane.xlu0 %650
        %652 = vadd.xlane.f32.xlu0 %v586
        %v653 = vpop.xlane.xlu0 %652
        %654 = vadd.xlane.f32.xlu0 %v591
        %v655 = vpop.xlane.xlu0 %654
        %656 = vadd.xlane.f32.xlu0 %v596
        %v657 = vpop.xlane.xlu0 %656
        %658 = vadd.xlane.f32.xlu0 %v601
        %v659 = vpop.xlane.xlu0 %658
        %660 = vadd.xlane.f32.xlu0 %v606
        %v661 = vpop.xlane.xlu0 %660
        %662 = vadd.xlane.f32.xlu0 %v611
        %v663 = vpop.xlane.xlu0 %662
        %664 = vadd.xlane.f32.xlu0 %v616
        %v665 = vpop.xlane.xlu0 %664
        %666 = vadd.xlane.f32.xlu0 %v621
        %v667 = vpop.xlane.xlu0 %666
        %668 = vadd.xlane.f32.xlu0 %v626
        %v669 = vpop.xlane.xlu0 %668
        %670 = vadd.xlane.f32.xlu0 %v631
        %v671 = vpop.xlane.xlu0 %670
        %672 = vadd.xlane.f32.xlu0 %v636
        %v673 = vpop.xlane.xlu0 %672
        %674 = vadd.xlane.f32.xlu0 %v641
        %v675 = vpop.xlane.xlu0 %674
        %v676 = vrcp.pop 128.0
        %v677 = vmul.f32 %v645, %v676
        %v678 = vmul.f32 %v647, %v676
        %v679 = vmul.f32 %v649, %v676
        %v680 = vmul.f32 %v651, %v676
        %v681 = vmul.f32 %v653, %v676
        %v682 = vmul.f32 %v655, %v676
        %v683 = vmul.f32 %v657, %v676
        %v684 = vmul.f32 %v659, %v676
        %v685 = vmul.f32 %v661, %v676
        %v686 = vmul.f32 %v663, %v676
        %v687 = vmul.f32 %v665, %v676
        %v688 = vmul.f32 %v667, %v676
        %v689 = vmul.f32 %v669, %v676
        %v690 = vmul.f32 %v671, %v676
        %v691 = vmul.f32 %v673, %v676
        %v692 = vmul.f32 %v675, %v676
        %v693 = vmul.f32 %v566, %v566
        %v694 = vmul.f32 %v571, %v571
        %v695 = vmul.f32 %v576, %v576
        %v696 = vmul.f32 %v581, %v581
        %v697 = vmul.f32 %v586, %v586
        %v698 = vmul.f32 %v591, %v591
        %v699 = vmul.f32 %v596, %v596
        %v700 = vmul.f32 %v601, %v601
        %v701 = vmul.f32 %v606, %v606
        %v702 = vmul.f32 %v611, %v611
        %v703 = vmul.f32 %v616, %v616
        %v704 = vmul.f32 %v621, %v621
        %v705 = vmul.f32 %v626, %v626
        %v706 = vmul.f32 %v631, %v631
        %v707 = vmul.f32 %v636, %v636
        %v708 = vmul.f32 %v641, %v641
        %709 = vadd.xlane.f32.xlu0 %v693
        %v710 = vpop.xlane.xlu0 %709
        %711 = vadd.xlane.f32.xlu0 %v694
        %v712 = vpop.xlane.xlu0 %711
        %713 = vadd.xlane.f32.xlu0 %v695
        %v714 = vpop.xlane.xlu0 %713
        %715 = vadd.xlane.f32.xlu0 %v696
        %v716 = vpop.xlane.xlu0 %715
        %717 = vadd.xlane.f32.xlu0 %v697
        %v718 = vpop.xlane.xlu0 %717
        %719 = vadd.xlane.f32.xlu0 %v698
        %v720 = vpop.xlane.xlu0 %719
        %721 = vadd.xlane.f32.xlu0 %v699
        %v722 = vpop.xlane.xlu0 %721
        %723 = vadd.xlane.f32.xlu0 %v700
        %v724 = vpop.xlane.xlu0 %723
        %725 = vadd.xlane.f32.xlu0 %v701
        %v726 = vpop.xlane.xlu0 %725
        %727 = vadd.xlane.f32.xlu0 %v702
        %v728 = vpop.xlane.xlu0 %727
        %729 = vadd.xlane.f32.xlu0 %v703
        %v730 = vpop.xlane.xlu0 %729
        %731 = vadd.xlane.f32.xlu0 %v704
        %v732 = vpop.xlane.xlu0 %731
        %733 = vadd.xlane.f32.xlu0 %v705
        %v734 = vpop.xlane.xlu0 %733
        %735 = vadd.xlane.f32.xlu0 %v706
        %v736 = vpop.xlane.xlu0 %735
        %737 = vadd.xlane.f32.xlu0 %v707
        %v738 = vpop.xlane.xlu0 %737
        %739 = vadd.xlane.f32.xlu0 %v708
        %v740 = vpop.xlane.xlu0 %739
        %v741 = vmul.f32 %v710, %v676
        %v742 = vmul.f32 %v712, %v676
        %v743 = vmul.f32 %v714, %v676
        %v744 = vmul.f32 %v716, %v676
        %v745 = vmul.f32 %v718, %v676
        %v746 = vmul.f32 %v720, %v676
        %v747 = vmul.f32 %v722, %v676
        %v748 = vmul.f32 %v724, %v676
        %v749 = vmul.f32 %v726, %v676
        %v750 = vmul.f32 %v728, %v676
        %v751 = vmul.f32 %v730, %v676
        %v752 = vmul.f32 %v732, %v676
        %v753 = vmul.f32 %v734, %v676
        %v754 = vmul.f32 %v736, %v676
        %v755 = vmul.f32 %v738, %v676
        %v756 = vmul.f32 %v740, %v676
        %v757 = vmul.f32 %v677, %v677
        %v758 = vmul.f32 %v678, %v678
        %v759 = vmul.f32 %v679, %v679
        %v760 = vmul.f32 %v680, %v680
        %v761 = vmul.f32 %v681, %v681
        %v762 = vmul.f32 %v682, %v682
        %v763 = vmul.f32 %v683, %v683
        %v764 = vmul.f32 %v684, %v684
        %v765 = vmul.f32 %v685, %v685
        %v766 = vmul.f32 %v686, %v686
        %v767 = vmul.f32 %v687, %v687
        %v768 = vmul.f32 %v688, %v688
        %v769 = vmul.f32 %v689, %v689
        %v770 = vmul.f32 %v690, %v690
        %v771 = vmul.f32 %v691, %v691
        %v772 = vmul.f32 %v692, %v692
        %v773 = vsub.f32 %v741, %v757
        %v774 = vsub.f32 %v742, %v758
        %v775 = vsub.f32 %v743, %v759
        %v776 = vsub.f32 %v744, %v760
        %v777 = vsub.f32 %v745, %v761
        %v778 = vsub.f32 %v746, %v762
        %v779 = vsub.f32 %v747, %v763
        %v780 = vsub.f32 %v748, %v764
        %v781 = vsub.f32 %v749, %v765
        %v782 = vsub.f32 %v750, %v766
        %v783 = vsub.f32 %v751, %v767
        %v784 = vsub.f32 %v752, %v768
        %v785 = vsub.f32 %v753, %v769
        %v786 = vsub.f32 %v754, %v770
        %v787 = vsub.f32 %v755, %v771
        %v788 = vsub.f32 %v756, %v772
        %v789 = vld [vmem:[%s2] sm:$0x1]
        %v790 = vadd.f32 %v773, 0.001
        %v791 = vadd.f32 %v774, 0.001
        %v792 = vadd.f32 %v775, 0.001
        %v793 = vadd.f32 %v776, 0.001
        %v794 = vadd.f32 %v777, 0.001
        %v795 = vadd.f32 %v778, 0.001
        %v796 = vadd.f32 %v779, 0.001
        %v797 = vadd.f32 %v780, 0.001
        %v798 = vadd.f32 %v781, 0.001
        %v799 = vadd.f32 %v782, 0.001
        %v800 = vadd.f32 %v783, 0.001
        %v801 = vadd.f32 %v784, 0.001
        %v802 = vadd.f32 %v785, 0.001
        %v803 = vadd.f32 %v786, 0.001
        %v804 = vadd.f32 %v787, 0.001
        %v805 = vadd.f32 %v788, 0.001
        %v806 = vrsqrt.pop %v790
        %v807 = vrsqrt.pop %v791
        %v808 = vrsqrt.pop %v792
        %v809 = vrsqrt.pop %v793
        %v810 = vrsqrt.pop %v794
        %v811 = vrsqrt.pop %v795
        %v812 = vrsqrt.pop %v796
        %v813 = vrsqrt.pop %v797
        %v814 = vrsqrt.pop %v798
        %v815 = vrsqrt.pop %v799
        %v816 = vrsqrt.pop %v800
        %v817 = vrsqrt.pop %v801
        %v818 = vrsqrt.pop %v802
        %v819 = vrsqrt.pop %v803
        %v820 = vrsqrt.pop %v804
        %v821 = vrsqrt.pop %v805
        %v823 = vlaneseq
        %v824 = vshrl.u32 %v823, 7
        %v825 = vsub.s32 0, %v824
        %v826 = vrot.slane %v789, %v825
        %v828 = vmul.f32 %v826, %v806
        %v829 = vmul.f32 %v826, %v807
        %v830 = vmul.f32 %v826, %v808
        %v831 = vmul.f32 %v826, %v809
        %v832 = vmul.f32 %v826, %v810
        %v833 = vmul.f32 %v826, %v811
        %v834 = vmul.f32 %v826, %v812
        %v835 = vmul.f32 %v826, %v813
        %v836 = vmul.f32 %v826, %v814
        %v837 = vmul.f32 %v826, %v815
        %v838 = vmul.f32 %v826, %v816
        %v839 = vmul.f32 %v826, %v817
        %v840 = vmul.f32 %v826, %v818
        %v841 = vmul.f32 %v826, %v819
        %v842 = vmul.f32 %v826, %v820
        %v843 = vmul.f32 %v826, %v821
        %v844 = vld [vmem:[%s3] sm:$0x1]
        %v845 = vmul.f32 %v677, %v828
        %v846 = vmul.f32 %v678, %v829
        %v847 = vmul.f32 %v679, %v830
        %v848 = vmul.f32 %v680, %v831
        %v849 = vmul.f32 %v681, %v832
        %v850 = vmul.f32 %v682, %v833
        %v851 = vmul.f32 %v683, %v834
        %v852 = vmul.f32 %v684, %v835
        %v853 = vmul.f32 %v685, %v836
        %v854 = vmul.f32 %v686, %v837
        %v855 = vmul.f32 %v687, %v838
        %v856 = vmul.f32 %v688, %v839
        %v857 = vmul.f32 %v689, %v840
        %v858 = vmul.f32 %v690, %v841
        %v859 = vmul.f32 %v691, %v842
        %v860 = vmul.f32 %v692, %v843
        %v862 = vlaneseq
        %v863 = vshrl.u32 %v862, 7
        %v864 = vsub.s32 0, %v863
        %v865 = vrot.slane %v844, %v864
        %v867 = vsub.f32 %v865, %v845
        %v868 = vsub.f32 %v865, %v846
        %v869 = vsub.f32 %v865, %v847
        %v870 = vsub.f32 %v865, %v848
        %v871 = vsub.f32 %v865, %v849
        %v872 = vsub.f32 %v865, %v850
        %v873 = vsub.f32 %v865, %v851
        %v874 = vsub.f32 %v865, %v852
        %v875 = vsub.f32 %v865, %v853
        %v876 = vsub.f32 %v865, %v854
        %v877 = vsub.f32 %v865, %v855
        %v878 = vsub.f32 %v865, %v856
        %v879 = vsub.f32 %v865, %v857
        %v880 = vsub.f32 %v865, %v858
        %v881 = vsub.f32 %v865, %v859
        %v882 = vsub.f32 %v865, %v860
        %v883 = vmul.f32 %v566, %v828
        %v884 = vmul.f32 %v571, %v829
        %v885 = vmul.f32 %v576, %v830
        %v886 = vmul.f32 %v581, %v831
        %v887 = vmul.f32 %v586, %v832
        %v888 = vmul.f32 %v591, %v833
        %v889 = vmul.f32 %v596, %v834
        %v890 = vmul.f32 %v601, %v835
        %v891 = vmul.f32 %v606, %v836
        %v892 = vmul.f32 %v611, %v837
        %v893 = vmul.f32 %v616, %v838
        %v894 = vmul.f32 %v621, %v839
        %v895 = vmul.f32 %v626, %v840
        %v896 = vmul.f32 %v631, %v841
        %v897 = vmul.f32 %v636, %v842
        %v898 = vmul.f32 %v641, %v843
        %v899 = vadd.f32 %v883, %v867
        %v900 = vadd.f32 %v884, %v868
        %v901 = vadd.f32 %v885, %v869
        %v902 = vadd.f32 %v886, %v870
        %v903 = vadd.f32 %v887, %v871
        %v904 = vadd.f32 %v888, %v872
        %v905 = vadd.f32 %v889, %v873
        %v906 = vadd.f32 %v890, %v874
        %v907 = vadd.f32 %v891, %v875
        %v908 = vadd.f32 %v892, %v876
        %v909 = vadd.f32 %v893, %v877
        %v910 = vadd.f32 %v894, %v878
        %v911 = vadd.f32 %v895, %v879
        %v912 = vadd.f32 %v896, %v880
        %v913 = vadd.f32 %v897, %v881
        %v914 = vadd.f32 %v898, %v882
        %v915 = vxor.u32 %v899, 2147483648
        %v916 = vxor.u32 %v900, 2147483648
        %v917 = vxor.u32 %v901, 2147483648
        %v918 = vxor.u32 %v902, 2147483648
        %v919 = vxor.u32 %v903, 2147483648
        %v920 = vxor.u32 %v904, 2147483648
        %v921 = vxor.u32 %v905, 2147483648
        %v922 = vxor.u32 %v906, 2147483648
        %v923 = vxor.u32 %v907, 2147483648
        %v924 = vxor.u32 %v908, 2147483648
        %v925 = vxor.u32 %v909, 2147483648
        %v926 = vxor.u32 %v910, 2147483648
        %v927 = vxor.u32 %v911, 2147483648
        %v928 = vxor.u32 %v912, 2147483648
        %v929 = vxor.u32 %v913, 2147483648
        %v930 = vxor.u32 %v914, 2147483648
        %v931 = vmul.f32 %v915, 1.442695
        %v932 = vpow.pop %v931
        %v933 = vmul.f32 %v916, 1.442695
        %v934 = vpow.pop %v933
        %v935 = vmul.f32 %v917, 1.442695
        %v936 = vpow.pop %v935
        %v937 = vmul.f32 %v918, 1.442695
        %v938 = vpow.pop %v937
        %v939 = vmul.f32 %v919, 1.442695
        %v940 = vpow.pop %v939
        %v941 = vmul.f32 %v920, 1.442695
        %v942 = vpow.pop %v941
        %v943 = vmul.f32 %v921, 1.442695
        %v944 = vpow.pop %v943
        %v945 = vmul.f32 %v922, 1.442695
        %v946 = vpow.pop %v945
        %v947 = vmul.f32 %v923, 1.442695
        %v948 = vpow.pop %v947
        %v949 = vmul.f32 %v924, 1.442695
        %v950 = vpow.pop %v949
        %v951 = vmul.f32 %v925, 1.442695
        %v952 = vpow.pop %v951
        %v953 = vmul.f32 %v926, 1.442695
        %v954 = vpow.pop %v953
        %v955 = vmul.f32 %v927, 1.442695
        %v956 = vpow.pop %v955
        %v957 = vmul.f32 %v928, 1.442695
        %v958 = vpow.pop %v957
        %v959 = vmul.f32 %v929, 1.442695
        %v960 = vpow.pop %v959
        %v961 = vmul.f32 %v930, 1.442695
        %v962 = vpow.pop %v961
        %v963 = vadd.f32 %v932, 1.0
        %v964 = vadd.f32 %v934, 1.0
        %v965 = vadd.f32 %v936, 1.0
        %v966 = vadd.f32 %v938, 1.0
        %v967 = vadd.f32 %v940, 1.0
        %v968 = vadd.f32 %v942, 1.0
        %v969 = vadd.f32 %v944, 1.0
        %v970 = vadd.f32 %v946, 1.0
        %v971 = vadd.f32 %v948, 1.0
        %v972 = vadd.f32 %v950, 1.0
        %v973 = vadd.f32 %v952, 1.0
        %v974 = vadd.f32 %v954, 1.0
        %v975 = vadd.f32 %v956, 1.0
        %v976 = vadd.f32 %v958, 1.0
        %v977 = vadd.f32 %v960, 1.0
        %v978 = vadd.f32 %v962, 1.0
        %v979 = vrcp.pop %v963
        %v980 = vmul.f32 1.0, %v979
        %v981 = vrcp.pop %v964
        %v982 = vmul.f32 1.0, %v981
        %v983 = vrcp.pop %v965
        %v984 = vmul.f32 1.0, %v983
        %v985 = vrcp.pop %v966
        %v986 = vmul.f32 1.0, %v985
        %v987 = vrcp.pop %v967
        %v988 = vmul.f32 1.0, %v987
        %v989 = vrcp.pop %v968
        %v990 = vmul.f32 1.0, %v989
        %v991 = vrcp.pop %v969
        %v992 = vmul.f32 1.0, %v991
        %v993 = vrcp.pop %v970
        %v994 = vmul.f32 1.0, %v993
        %v995 = vrcp.pop %v971
        %v996 = vmul.f32 1.0, %v995
        %v997 = vrcp.pop %v972
        %v998 = vmul.f32 1.0, %v997
        %v999 = vrcp.pop %v973
        %v1000 = vmul.f32 1.0, %v999
        %v1001 = vrcp.pop %v974
        %v1002 = vmul.f32 1.0, %v1001
        %v1003 = vrcp.pop %v975
        %v1004 = vmul.f32 1.0, %v1003
        %v1005 = vrcp.pop %v976
        %v1006 = vmul.f32 1.0, %v1005
        %v1007 = vrcp.pop %v977
        %v1008 = vmul.f32 1.0, %v1007
        %v1009 = vrcp.pop %v978
        %v1010 = vmul.f32 1.0, %v1009
        %v1011 = vmul.f32 %v899, %v980
        %v1012 = vmul.f32 %v900, %v982
        %v1013 = vmul.f32 %v901, %v984
        %v1014 = vmul.f32 %v902, %v986
        %v1015 = vmul.f32 %v903, %v988
        %v1016 = vmul.f32 %v904, %v990
        %v1017 = vmul.f32 %v905, %v992
        %v1018 = vmul.f32 %v906, %v994
        %v1019 = vmul.f32 %v907, %v996
        %v1020 = vmul.f32 %v908, %v998
        %v1021 = vmul.f32 %v909, %v1000
        %v1022 = vmul.f32 %v910, %v1002
        %v1023 = vmul.f32 %v911, %v1004
        %v1024 = vmul.f32 %v912, %v1006
        %v1025 = vmul.f32 %v913, %v1008
        %v1026 = vmul.f32 %v914, %v1010
        %v1027 = vld [vmem:[%s4] sm:$0xff]
        %v1028 = vld [vmem:[%s4 + $0x8] sm:$0xff]
        %v1029 = vld [vmem:[%s4 + $0x10] sm:$0xff]
        %v1030 = vld [vmem:[%s4 + $0x18] sm:$0xff]
        %v1031 = vld [vmem:[%s4 + $0x20] sm:$0xff]
        %v1032 = vld [vmem:[%s4 + $0x28] sm:$0xff]
        %v1033 = vld [vmem:[%s4 + $0x30] sm:$0xff]
        %v1034 = vld [vmem:[%s4 + $0x38] sm:$0xff]
        %v1035 = vld [vmem:[%s4 + $0x40] sm:$0xff]
        %v1036 = vld [vmem:[%s4 + $0x48] sm:$0xff]
        %v1037 = vld [vmem:[%s4 + $0x50] sm:$0xff]
        %v1038 = vld [vmem:[%s4 + $0x58] sm:$0xff]
        %v1039 = vld [vmem:[%s4 + $0x60] sm:$0xff]
        %v1040 = vld [vmem:[%s4 + $0x68] sm:$0xff]
        %v1041 = vld [vmem:[%s4 + $0x70] sm:$0xff]
        %v1042 = vld [vmem:[%s4 + $0x78] sm:$0xff]
        %1043 = vmatprep.subr.mxu0 0.0
        %1044 = vmatpush1.msra.mxu0 %v1027
        %1045 = vmatprep.subr.mxu0 0.0
        %1046 = vmatpush1.msra.mxu0 %v1028
        %1047 = vmatprep.subr.mxu0 0.0
        %1048 = vmatpush1.msra.mxu0 %v1029
        %1049 = vmatprep.subr.mxu0 0.0
        %1050 = vmatpush1.msra.mxu0 %v1030
        %1051 = vmatprep.subr.mxu0 0.0
        %1052 = vmatpush1.msra.mxu0 %v1031
        %1053 = vmatprep.subr.mxu0 0.0
        %1054 = vmatpush1.msra.mxu0 %v1032
        %1055 = vmatprep.subr.mxu0 0.0
        %1056 = vmatpush1.msra.mxu0 %v1033
        %1057 = vmatprep.subr.mxu0 0.0
        %1058 = vmatpush1.msra.mxu0 %v1034
        %1059 = vmatprep.subr.mxu0 0.0
        %1060 = vmatpush1.msra.mxu0 %v1035
        %1061 = vmatprep.subr.mxu0 0.0
        %1062 = vmatpush1.msra.mxu0 %v1036
        %1063 = vmatprep.subr.mxu0 0.0
        %1064 = vmatpush1.msra.mxu0 %v1037
        %1065 = vmatprep.subr.mxu0 0.0
        %1066 = vmatpush1.msra.mxu0 %v1038
        %1067 = vmatprep.subr.mxu0 0.0
        %1068 = vmatpush1.msra.mxu0 %v1039
        %1069 = vmatprep.subr.mxu0 0.0
        %1070 = vmatpush1.msra.mxu0 %v1040
        %1071 = vmatprep.subr.mxu0 0.0
        %1072 = vmatpush1.msra.mxu0 %v1041
        %1073 = vmatprep.subr.mxu0 0.0
        %1074 = vmatpush1.msra.mxu0 %v1042
        %1075 = vmatprep.subr.mxu0 0.0
        %1076 = vmatpush1.msra.mxu0 0.0
        %1077 = vmatprep.subr.mxu0 0.0
        %1078 = vmatpush1.msra.mxu0 0.0
        %1079 = vmatprep.subr.mxu0 0.0
        %1080 = vmatpush1.msra.mxu0 0.0
        %1081 = vmatprep.subr.mxu0 0.0
        %1082 = vmatpush1.msra.mxu0 0.0
        %1083 = vmatprep.subr.mxu0 0.0
        %1084 = vmatpush1.msra.mxu0 0.0
        %1085 = vmatprep.subr.mxu0 0.0
        %1086 = vmatpush1.msra.mxu0 0.0
        %1087 = vmatprep.subr.mxu0 0.0
        %1088 = vmatpush1.msra.mxu0 0.0
        %1089 = vmatprep.subr.mxu0 0.0
        %1090 = vmatpush1.msra.mxu0 0.0
        %1091 = vmatprep.subr.mxu0 0.0
        %1092 = vmatpush1.msra.mxu0 0.0
        %1093 = vmatprep.subr.mxu0 0.0
        %1094 = vmatpush1.msra.mxu0 0.0
        %1095 = vmatprep.subr.mxu0 0.0
        %1096 = vmatpush1.msra.mxu0 0.0
        %1097 = vmatprep.subr.mxu0 0.0
        %1098 = vmatpush1.msra.mxu0 0.0
        %1099 = vmatprep.subr.mxu0 0.0
        %1100 = vmatpush1.msra.mxu0 0.0
        %1101 = vmatprep.subr.mxu0 0.0
        %1102 = vmatpush1.msra.mxu0 0.0
        %1103 = vmatprep.subr.mxu0 0.0
        %1104 = vmatpush1.msra.mxu0 0.0
        %1105 = vmatprep.subr.mxu0 0.0
        %1106 = vmatpush1.msra.mxu0 0.0
        %1107 = vmatprep.mubr.f32.mxu0 0.0
        %1108 = vmatmul.mubr.f32.gmra.mrb[0].mxu0 %v1011
        %v1109 = vpop.f32.mrb[0].mxu0
        %v1110 = vadd.f32 0.0, %v1109
        %v1111 = vpop.f32.mrb[0].mxu0
        %1112 = vmatprep.mubr.f32.mxu0 0.0
        %1113 = vmatmul.mubr.f32.gmra.mrb[0].mxu0 %v1012
        %v1114 = vpop.f32.mrb[0].mxu0
        %v1115 = vadd.f32 0.0, %v1114
        %v1116 = vpop.f32.mrb[0].mxu0
        %1117 = vmatprep.mubr.f32.mxu0 0.0
        %1118 = vmatmul.mubr.f32.gmra.mrb[0].mxu0 %v1013
        %v1119 = vpop.f32.mrb[0].mxu0
        %v1120 = vadd.f32 0.0, %v1119
        %v1121 = vpop.f32.mrb[0].mxu0
        %1122 = vmatprep.mubr.f32.mxu0 0.0
        %1123 = vmatmul.mubr.f32.gmra.mrb[0].mxu0 %v1014
        %v1124 = vpop.f32.mrb[0].mxu0
        %v1125 = vadd.f32 0.0, %v1124
        %v1126 = vpop.f32.mrb[0].mxu0
        %1127 = vmatprep.mubr.f32.mxu0 0.0
        %1128 = vmatmul.mubr.f32.gmra.mrb[0].mxu0 %v1015
        %v1129 = vpop.f32.mrb[0].mxu0
        %v1130 = vadd.f32 0.0, %v1129
        %v1131 = vpop.f32.mrb[0].mxu0
        %1132 = vmatprep.mubr.f32.mxu0 0.0
        %1133 = vmatmul.mubr.f32.gmra.mrb[0].mxu0 %v1016
        %v1134 = vpop.f32.mrb[0].mxu0
        %v1135 = vadd.f32 0.0, %v1134
        %v1136 = vpop.f32.mrb[0].mxu0
        %1137 = vmatprep.mubr.f32.mxu0 0.0
        %1138 = vmatmul.mubr.f32.gmra.mrb[0].mxu0 %v1017
        %v1139 = vpop.f32.mrb[0].mxu0
        %v1140 = vadd.f32 0.0, %v1139
        %v1141 = vpop.f32.mrb[0].mxu0
        %1142 = vmatprep.mubr.f32.mxu0 0.0
        %1143 = vmatmul.mubr.f32.gmra.mrb[0].mxu0 %v1018
        %v1144 = vpop.f32.mrb[0].mxu0
        %v1145 = vadd.f32 0.0, %v1144
        %v1146 = vpop.f32.mrb[0].mxu0
        %1147 = vmatprep.mubr.f32.mxu0 0.0
        %1148 = vmatmul.mubr.f32.gmra.mrb[0].mxu0 %v1019
        %v1149 = vpop.f32.mrb[0].mxu0
        %v1150 = vadd.f32 0.0, %v1149
        %v1151 = vpop.f32.mrb[0].mxu0
        %1152 = vmatprep.mubr.f32.mxu0 0.0
        %1153 = vmatmul.mubr.f32.gmra.mrb[0].mxu0 %v1020
        %v1154 = vpop.f32.mrb[0].mxu0
        %v1155 = vadd.f32 0.0, %v1154
        %v1156 = vpop.f32.mrb[0].mxu0
        %1157 = vmatprep.mubr.f32.mxu0 0.0
        %1158 = vmatmul.mubr.f32.gmra.mrb[0].mxu0 %v1021
        %v1159 = vpop.f32.mrb[0].mxu0
        %v1160 = vadd.f32 0.0, %v1159
        %v1161 = vpop.f32.mrb[0].mxu0
        %1162 = vmatprep.mubr.f32.mxu0 0.0
        %1163 = vmatmul.mubr.f32.gmra.mrb[0].mxu0 %v1022
        %v1164 = vpop.f32.mrb[0].mxu0
        %v1165 = vadd.f32 0.0, %v1164
        %v1166 = vpop.f32.mrb[0].mxu0
        %1167 = vmatprep.mubr.f32.mxu0 0.0
        %1168 = vmatmul.mubr.f32.gmra.mrb[0].mxu0 %v1023
        %v1169 = vpop.f32.mrb[0].mxu0
        %v1170 = vadd.f32 0.0, %v1169
        %v1171 = vpop.f32.mrb[0].mxu0
        %1172 = vmatprep.mubr.f32.mxu0 0.0
        %1173 = vmatmul.mubr.f32.gmra.mrb[0].mxu0 %v1024
        %v1174 = vpop.f32.mrb[0].mxu0
        %v1175 = vadd.f32 0.0, %v1174
        %v1176 = vpop.f32.mrb[0].mxu0
        %1177 = vmatprep.mubr.f32.mxu0 0.0
        %1178 = vmatmul.mubr.f32.gmra.mrb[0].mxu0 %v1025
        %v1179 = vpop.f32.mrb[0].mxu0
        %v1180 = vadd.f32 0.0, %v1179
        %v1181 = vpop.f32.mrb[0].mxu0
        %1182 = vmatprep.mubr.f32.mxu0 0.0
        %1183 = vmatmul.mubr.f32.gmra.mrb[0].mxu0 %v1026
        %v1184 = vpop.f32.mrb[0].mxu0
        %v1185 = vadd.f32 0.0, %v1184
        %v1186 = vpop.f32.mrb[0].mxu0
        %1187 = vdwg.mxu0
        %1188 = vadd.xlane.f32.xlu0 %v1110
        %v1189 = vpop.xlane.xlu0 %1188
        %1190 = vadd.xlane.f32.xlu0 %v1115
        %v1191 = vpop.xlane.xlu0 %1190
        %1192 = vadd.xlane.f32.xlu0 %v1120
        %v1193 = vpop.xlane.xlu0 %1192
        %1194 = vadd.xlane.f32.xlu0 %v1125
        %v1195 = vpop.xlane.xlu0 %1194
        %1196 = vadd.xlane.f32.xlu0 %v1130
        %v1197 = vpop.xlane.xlu0 %1196
        %1198 = vadd.xlane.f32.xlu0 %v1135
        %v1199 = vpop.xlane.xlu0 %1198
        %1200 = vadd.xlane.f32.xlu0 %v1140
        %v1201 = vpop.xlane.xlu0 %1200
        %1202 = vadd.xlane.f32.xlu0 %v1145
        %v1203 = vpop.xlane.xlu0 %1202
        %1204 = vadd.xlane.f32.xlu0 %v1150
        %v1205 = vpop.xlane.xlu0 %1204
        %1206 = vadd.xlane.f32.xlu0 %v1155
        %v1207 = vpop.xlane.xlu0 %1206
        %1208 = vadd.xlane.f32.xlu0 %v1160
        %v1209 = vpop.xlane.xlu0 %1208
        %1210 = vadd.xlane.f32.xlu0 %v1165
        %v1211 = vpop.xlane.xlu0 %1210
        %1212 = vadd.xlane.f32.xlu0 %v1170
        %v1213 = vpop.xlane.xlu0 %1212
        %1214 = vadd.xlane.f32.xlu0 %v1175
        %v1215 = vpop.xlane.xlu0 %1214
        %1216 = vadd.xlane.f32.xlu0 %v1180
        %v1217 = vpop.xlane.xlu0 %1216
        %1218 = vadd.xlane.f32.xlu0 %v1185
        %v1219 = vpop.xlane.xlu0 %1218
        %v1220 = vmul.f32 %v1189, %v676
        %v1221 = vmul.f32 %v1191, %v676
        %v1222 = vmul.f32 %v1193, %v676
        %v1223 = vmul.f32 %v1195, %v676
        %v1224 = vmul.f32 %v1197, %v676
        %v1225 = vmul.f32 %v1199, %v676
        %v1226 = vmul.f32 %v1201, %v676
        %v1227 = vmul.f32 %v1203, %v676
        %v1228 = vmul.f32 %v1205, %v676
        %v1229 = vmul.f32 %v1207, %v676
        %v1230 = vmul.f32 %v1209, %v676
        %v1231 = vmul.f32 %v1211, %v676
        %v1232 = vmul.f32 %v1213, %v676
        %v1233 = vmul.f32 %v1215, %v676
        %v1234 = vmul.f32 %v1217, %v676
        %v1235 = vmul.f32 %v1219, %v676
        %v1236 = vmul.f32 %v1110, %v1110
        %v1237 = vmul.f32 %v1115, %v1115
        %v1238 = vmul.f32 %v1120, %v1120
        %v1239 = vmul.f32 %v1125, %v1125
        %v1240 = vmul.f32 %v1130, %v1130
        %v1241 = vmul.f32 %v1135, %v1135
        %v1242 = vmul.f32 %v1140, %v1140
        %v1243 = vmul.f32 %v1145, %v1145
        %v1244 = vmul.f32 %v1150, %v1150
        %v1245 = vmul.f32 %v1155, %v1155
        %v1246 = vmul.f32 %v1160, %v1160
        %v1247 = vmul.f32 %v1165, %v1165
        %v1248 = vmul.f32 %v1170, %v1170
        %v1249 = vmul.f32 %v1175, %v1175
        %v1250 = vmul.f32 %v1180, %v1180
        %v1251 = vmul.f32 %v1185, %v1185
        %1252 = vadd.xlane.f32.xlu0 %v1236
        %v1253 = vpop.xlane.xlu0 %1252
        %1254 = vadd.xlane.f32.xlu0 %v1237
        %v1255 = vpop.xlane.xlu0 %1254
        %1256 = vadd.xlane.f32.xlu0 %v1238
        %v1257 = vpop.xlane.xlu0 %1256
        %1258 = vadd.xlane.f32.xlu0 %v1239
        %v1259 = vpop.xlane.xlu0 %1258
        %1260 = vadd.xlane.f32.xlu0 %v1240
        %v1261 = vpop.xlane.xlu0 %1260
        %1262 = vadd.xlane.f32.xlu0 %v1241
        %v1263 = vpop.xlane.xlu0 %1262
        %1264 = vadd.xlane.f32.xlu0 %v1242
        %v1265 = vpop.xlane.xlu0 %1264
        %1266 = vadd.xlane.f32.xlu0 %v1243
        %v1267 = vpop.xlane.xlu0 %1266
        %1268 = vadd.xlane.f32.xlu0 %v1244
        %v1269 = vpop.xlane.xlu0 %1268
        %1270 = vadd.xlane.f32.xlu0 %v1245
        %v1271 = vpop.xlane.xlu0 %1270
        %1272 = vadd.xlane.f32.xlu0 %v1246
        %v1273 = vpop.xlane.xlu0 %1272
        %1274 = vadd.xlane.f32.xlu0 %v1247
        %v1275 = vpop.xlane.xlu0 %1274
        %1276 = vadd.xlane.f32.xlu0 %v1248
        %v1277 = vpop.xlane.xlu0 %1276
        %1278 = vadd.xlane.f32.xlu0 %v1249
        %v1279 = vpop.xlane.xlu0 %1278
        %1280 = vadd.xlane.f32.xlu0 %v1250
        %v1281 = vpop.xlane.xlu0 %1280
        %1282 = vadd.xlane.f32.xlu0 %v1251
        %v1283 = vpop.xlane.xlu0 %1282
        %v1284 = vmul.f32 %v1253, %v676
        %v1285 = vmul.f32 %v1255, %v676
        %v1286 = vmul.f32 %v1257, %v676
        %v1287 = vmul.f32 %v1259, %v676
        %v1288 = vmul.f32 %v1261, %v676
        %v1289 = vmul.f32 %v1263, %v676
        %v1290 = vmul.f32 %v1265, %v676
        %v1291 = vmul.f32 %v1267, %v676
        %v1292 = vmul.f32 %v1269, %v676
        %v1293 = vmul.f32 %v1271, %v676
        %v1294 = vmul.f32 %v1273, %v676
        %v1295 = vmul.f32 %v1275, %v676
        %v1296 = vmul.f32 %v1277, %v676
        %v1297 = vmul.f32 %v1279, %v676
        %v1298 = vmul.f32 %v1281, %v676
        %v1299 = vmul.f32 %v1283, %v676
        %v1300 = vmul.f32 %v1220, %v1220
        %v1301 = vmul.f32 %v1221, %v1221
        %v1302 = vmul.f32 %v1222, %v1222
        %v1303 = vmul.f32 %v1223, %v1223
        %v1304 = vmul.f32 %v1224, %v1224
        %v1305 = vmul.f32 %v1225, %v1225
        %v1306 = vmul.f32 %v1226, %v1226
        %v1307 = vmul.f32 %v1227, %v1227
        %v1308 = vmul.f32 %v1228, %v1228
        %v1309 = vmul.f32 %v1229, %v1229
        %v1310 = vmul.f32 %v1230, %v1230
        %v1311 = vmul.f32 %v1231, %v1231
        %v1312 = vmul.f32 %v1232, %v1232
        %v1313 = vmul.f32 %v1233, %v1233
        %v1314 = vmul.f32 %v1234, %v1234
        %v1315 = vmul.f32 %v1235, %v1235
        %v1316 = vsub.f32 %v1284, %v1300
        %v1317 = vsub.f32 %v1285, %v1301
        %v1318 = vsub.f32 %v1286, %v1302
        %v1319 = vsub.f32 %v1287, %v1303
        %v1320 = vsub.f32 %v1288, %v1304
        %v1321 = vsub.f32 %v1289, %v1305
        %v1322 = vsub.f32 %v1290, %v1306
        %v1323 = vsub.f32 %v1291, %v1307
        %v1324 = vsub.f32 %v1292, %v1308
        %v1325 = vsub.f32 %v1293, %v1309
        %v1326 = vsub.f32 %v1294, %v1310
        %v1327 = vsub.f32 %v1295, %v1311
        %v1328 = vsub.f32 %v1296, %v1312
        %v1329 = vsub.f32 %v1297, %v1313
        %v1330 = vsub.f32 %v1298, %v1314
        %v1331 = vsub.f32 %v1299, %v1315
        %v1332 = vld [vmem:[%s5] sm:$0x1]
        %v1333 = vadd.f32 %v1316, 0.001
        %v1334 = vadd.f32 %v1317, 0.001
        %v1335 = vadd.f32 %v1318, 0.001
        %v1336 = vadd.f32 %v1319, 0.001
        %v1337 = vadd.f32 %v1320, 0.001
        %v1338 = vadd.f32 %v1321, 0.001
        %v1339 = vadd.f32 %v1322, 0.001
        %v1340 = vadd.f32 %v1323, 0.001
        %v1341 = vadd.f32 %v1324, 0.001
        %v1342 = vadd.f32 %v1325, 0.001
        %v1343 = vadd.f32 %v1326, 0.001
        %v1344 = vadd.f32 %v1327, 0.001
        %v1345 = vadd.f32 %v1328, 0.001
        %v1346 = vadd.f32 %v1329, 0.001
        %v1347 = vadd.f32 %v1330, 0.001
        %v1348 = vadd.f32 %v1331, 0.001
        %v1349 = vrsqrt.pop %v1333
        %v1350 = vrsqrt.pop %v1334
        %v1351 = vrsqrt.pop %v1335
        %v1352 = vrsqrt.pop %v1336
        %v1353 = vrsqrt.pop %v1337
        %v1354 = vrsqrt.pop %v1338
        %v1355 = vrsqrt.pop %v1339
        %v1356 = vrsqrt.pop %v1340
        %v1357 = vrsqrt.pop %v1341
        %v1358 = vrsqrt.pop %v1342
        %v1359 = vrsqrt.pop %v1343
        %v1360 = vrsqrt.pop %v1344
        %v1361 = vrsqrt.pop %v1345
        %v1362 = vrsqrt.pop %v1346
        %v1363 = vrsqrt.pop %v1347
        %v1364 = vrsqrt.pop %v1348
        %v1366 = vlaneseq
        %v1367 = vshrl.u32 %v1366, 7
        %v1368 = vsub.s32 0, %v1367
        %v1369 = vrot.slane %v1332, %v1368
        %v1371 = vmul.f32 %v1369, %v1349
        %v1372 = vmul.f32 %v1369, %v1350
        %v1373 = vmul.f32 %v1369, %v1351
        %v1374 = vmul.f32 %v1369, %v1352
        %v1375 = vmul.f32 %v1369, %v1353
        %v1376 = vmul.f32 %v1369, %v1354
        %v1377 = vmul.f32 %v1369, %v1355
        %v1378 = vmul.f32 %v1369, %v1356
        %v1379 = vmul.f32 %v1369, %v1357
        %v1380 = vmul.f32 %v1369, %v1358
        %v1381 = vmul.f32 %v1369, %v1359
        %v1382 = vmul.f32 %v1369, %v1360
        %v1383 = vmul.f32 %v1369, %v1361
        %v1384 = vmul.f32 %v1369, %v1362
        %v1385 = vmul.f32 %v1369, %v1363
        %v1386 = vmul.f32 %v1369, %v1364
        %v1387 = vld [vmem:[%s6] sm:$0x1]
        %v1388 = vmul.f32 %v1220, %v1371
        %v1389 = vmul.f32 %v1221, %v1372
        %v1390 = vmul.f32 %v1222, %v1373
        %v1391 = vmul.f32 %v1223, %v1374
        %v1392 = vmul.f32 %v1224, %v1375
        %v1393 = vmul.f32 %v1225, %v1376
        %v1394 = vmul.f32 %v1226, %v1377
        %v1395 = vmul.f32 %v1227, %v1378
        %v1396 = vmul.f32 %v1228, %v1379
        %v1397 = vmul.f32 %v1229, %v1380
        %v1398 = vmul.f32 %v1230, %v1381
        %v1399 = vmul.f32 %v1231, %v1382
        %v1400 = vmul.f32 %v1232, %v1383
        %v1401 = vmul.f32 %v1233, %v1384
        %v1402 = vmul.f32 %v1234, %v1385
        %v1403 = vmul.f32 %v1235, %v1386
        %v1405 = vlaneseq
        %v1406 = vshrl.u32 %v1405, 7
        %v1407 = vsub.s32 0, %v1406
        %v1408 = vrot.slane %v1387, %v1407
        %v1410 = vsub.f32 %v1408, %v1388
        %v1411 = vsub.f32 %v1408, %v1389
        %v1412 = vsub.f32 %v1408, %v1390
        %v1413 = vsub.f32 %v1408, %v1391
        %v1414 = vsub.f32 %v1408, %v1392
        %v1415 = vsub.f32 %v1408, %v1393
        %v1416 = vsub.f32 %v1408, %v1394
        %v1417 = vsub.f32 %v1408, %v1395
        %v1418 = vsub.f32 %v1408, %v1396
        %v1419 = vsub.f32 %v1408, %v1397
        %v1420 = vsub.f32 %v1408, %v1398
        %v1421 = vsub.f32 %v1408, %v1399
        %v1422 = vsub.f32 %v1408, %v1400
        %v1423 = vsub.f32 %v1408, %v1401
        %v1424 = vsub.f32 %v1408, %v1402
        %v1425 = vsub.f32 %v1408, %v1403
        %v1426 = vmul.f32 %v1110, %v1371
        %v1427 = vmul.f32 %v1115, %v1372
        %v1428 = vmul.f32 %v1120, %v1373
        %v1429 = vmul.f32 %v1125, %v1374
        %v1430 = vmul.f32 %v1130, %v1375
        %v1431 = vmul.f32 %v1135, %v1376
        %v1432 = vmul.f32 %v1140, %v1377
        %v1433 = vmul.f32 %v1145, %v1378
        %v1434 = vmul.f32 %v1150, %v1379
        %v1435 = vmul.f32 %v1155, %v1380
        %v1436 = vmul.f32 %v1160, %v1381
        %v1437 = vmul.f32 %v1165, %v1382
        %v1438 = vmul.f32 %v1170, %v1383
        %v1439 = vmul.f32 %v1175, %v1384
        %v1440 = vmul.f32 %v1180, %v1385
        %v1441 = vmul.f32 %v1185, %v1386
        %v1442 = vadd.f32 %v1426, %v1410
        %v1443 = vadd.f32 %v1427, %v1411
        %v1444 = vadd.f32 %v1428, %v1412
        %v1445 = vadd.f32 %v1429, %v1413
        %v1446 = vadd.f32 %v1430, %v1414
        %v1447 = vadd.f32 %v1431, %v1415
        %v1448 = vadd.f32 %v1432, %v1416
        %v1449 = vadd.f32 %v1433, %v1417
        %v1450 = vadd.f32 %v1434, %v1418
        %v1451 = vadd.f32 %v1435, %v1419
        %v1452 = vadd.f32 %v1436, %v1420
        %v1453 = vadd.f32 %v1437, %v1421
        %v1454 = vadd.f32 %v1438, %v1422
        %v1455 = vadd.f32 %v1439, %v1423
        %v1456 = vadd.f32 %v1440, %v1424
        %v1457 = vadd.f32 %v1441, %v1425
        %v1458 = vxor.u32 %v1442, 2147483648
        %v1459 = vxor.u32 %v1443, 2147483648
        %v1460 = vxor.u32 %v1444, 2147483648
        %v1461 = vxor.u32 %v1445, 2147483648
        %v1462 = vxor.u32 %v1446, 2147483648
        %v1463 = vxor.u32 %v1447, 2147483648
        %v1464 = vxor.u32 %v1448, 2147483648
        %v1465 = vxor.u32 %v1449, 2147483648
        %v1466 = vxor.u32 %v1450, 2147483648
        %v1467 = vxor.u32 %v1451, 2147483648
        %v1468 = vxor.u32 %v1452, 2147483648
        %v1469 = vxor.u32 %v1453, 2147483648
        %v1470 = vxor.u32 %v1454, 2147483648
        %v1471 = vxor.u32 %v1455, 2147483648
        %v1472 = vxor.u32 %v1456, 2147483648
        %v1473 = vxor.u32 %v1457, 2147483648
        %v1474 = vmul.f32 %v1458, 1.442695
        %v1475 = vpow.pop %v1474
        %v1476 = vmul.f32 %v1459, 1.442695
        %v1477 = vpow.pop %v1476
        %v1478 = vmul.f32 %v1460, 1.442695
        %v1479 = vpow.pop %v1478
        %v1480 = vmul.f32 %v1461, 1.442695
        %v1481 = vpow.pop %v1480
        %v1482 = vmul.f32 %v1462, 1.442695
        %v1483 = vpow.pop %v1482
        %v1484 = vmul.f32 %v1463, 1.442695
        %v1485 = vpow.pop %v1484
        %v1486 = vmul.f32 %v1464, 1.442695
        %v1487 = vpow.pop %v1486
        %v1488 = vmul.f32 %v1465, 1.442695
        %v1489 = vpow.pop %v1488
        %v1490 = vmul.f32 %v1466, 1.442695
        %v1491 = vpow.pop %v1490
        %v1492 = vmul.f32 %v1467, 1.442695
        %v1493 = vpow.pop %v1492
        %v1494 = vmul.f32 %v1468, 1.442695
        %v1495 = vpow.pop %v1494
        %v1496 = vmul.f32 %v1469, 1.442695
        %v1497 = vpow.pop %v1496
        %v1498 = vmul.f32 %v1470, 1.442695
        %v1499 = vpow.pop %v1498
        %v1500 = vmul.f32 %v1471, 1.442695
        %v1501 = vpow.pop %v1500
        %v1502 = vmul.f32 %v1472, 1.442695
        %v1503 = vpow.pop %v1502
        %v1504 = vmul.f32 %v1473, 1.442695
        %v1505 = vpow.pop %v1504
        %v1506 = vadd.f32 %v1475, 1.0
        %v1507 = vadd.f32 %v1477, 1.0
        %v1508 = vadd.f32 %v1479, 1.0
        %v1509 = vadd.f32 %v1481, 1.0
        %v1510 = vadd.f32 %v1483, 1.0
        %v1511 = vadd.f32 %v1485, 1.0
        %v1512 = vadd.f32 %v1487, 1.0
        %v1513 = vadd.f32 %v1489, 1.0
        %v1514 = vadd.f32 %v1491, 1.0
        %v1515 = vadd.f32 %v1493, 1.0
        %v1516 = vadd.f32 %v1495, 1.0
        %v1517 = vadd.f32 %v1497, 1.0
        %v1518 = vadd.f32 %v1499, 1.0
        %v1519 = vadd.f32 %v1501, 1.0
        %v1520 = vadd.f32 %v1503, 1.0
        %v1521 = vadd.f32 %v1505, 1.0
        %v1522 = vrcp.pop %v1506
        %v1523 = vmul.f32 1.0, %v1522
        %v1524 = vrcp.pop %v1507
        %v1525 = vmul.f32 1.0, %v1524
        %v1526 = vrcp.pop %v1508
        %v1527 = vmul.f32 1.0, %v1526
        %v1528 = vrcp.pop %v1509
        %v1529 = vmul.f32 1.0, %v1528
        %v1530 = vrcp.pop %v1510
        %v1531 = vmul.f32 1.0, %v1530
        %v1532 = vrcp.pop %v1511
        %v1533 = vmul.f32 1.0, %v1532
        %v1534 = vrcp.pop %v1512
        %v1535 = vmul.f32 1.0, %v1534
        %v1536 = vrcp.pop %v1513
        %v1537 = vmul.f32 1.0, %v1536
        %v1538 = vrcp.pop %v1514
        %v1539 = vmul.f32 1.0, %v1538
        %v1540 = vrcp.pop %v1515
        %v1541 = vmul.f32 1.0, %v1540
        %v1542 = vrcp.pop %v1516
        %v1543 = vmul.f32 1.0, %v1542
        %v1544 = vrcp.pop %v1517
        %v1545 = vmul.f32 1.0, %v1544
        %v1546 = vrcp.pop %v1518
        %v1547 = vmul.f32 1.0, %v1546
        %v1548 = vrcp.pop %v1519
        %v1549 = vmul.f32 1.0, %v1548
        %v1550 = vrcp.pop %v1520
        %v1551 = vmul.f32 1.0, %v1550
        %v1552 = vrcp.pop %v1521
        %v1553 = vmul.f32 1.0, %v1552
        %v1554 = vmul.f32 %v1442, %v1523
        %v1555 = vmul.f32 %v1443, %v1525
        %v1556 = vmul.f32 %v1444, %v1527
        %v1557 = vmul.f32 %v1445, %v1529
        %v1558 = vmul.f32 %v1446, %v1531
        %v1559 = vmul.f32 %v1447, %v1533
        %v1560 = vmul.f32 %v1448, %v1535
        %v1561 = vmul.f32 %v1449, %v1537
        %v1562 = vmul.f32 %v1450, %v1539
        %v1563 = vmul.f32 %v1451, %v1541
        %v1564 = vmul.f32 %v1452, %v1543
        %v1565 = vmul.f32 %v1453, %v1545
        %v1566 = vmul.f32 %v1454, %v1547
        %v1567 = vmul.f32 %v1455, %v1549
        %v1568 = vmul.f32 %v1456, %v1551
        %v1569 = vmul.f32 %v1457, %v1553
        %v1570 = vld [vmem:[%s7] sm:$0xff]
        %v1571 = vld [vmem:[%s7 + $0x8] sm:$0xff]
        %v1572 = vld [vmem:[%s7 + $0x10] sm:$0xff]
        %v1573 = vld [vmem:[%s7 + $0x18] sm:$0xff]
        %v1574 = vld [vmem:[%s7 + $0x20] sm:$0xff]
        %v1575 = vld [vmem:[%s7 + $0x28] sm:$0xff]
        %v1576 = vld [vmem:[%s7 + $0x30] sm:$0xff]
        %v1577 = vld [vmem:[%s7 + $0x38] sm:$0xff]
        %v1578 = vld [vmem:[%s7 + $0x40] sm:$0xff]
        %v1579 = vld [vmem:[%s7 + $0x48] sm:$0xff]
        %v1580 = vld [vmem:[%s7 + $0x50] sm:$0xff]
        %v1581 = vld [vmem:[%s7 + $0x58] sm:$0xff]
        %v1582 = vld [vmem:[%s7 + $0x60] sm:$0xff]
        %v1583 = vld [vmem:[%s7 + $0x68] sm:$0xff]
        %v1584 = vld [vmem:[%s7 + $0x70] sm:$0xff]
        %v1585 = vld [vmem:[%s7 + $0x78] sm:$0xff]
        %1586 = vmatprep.subr.mxu0 0.0
        %1587 = vmatpush1.msra.mxu0 %v1570
        %1588 = vmatprep.subr.mxu0 0.0
        %1589 = vmatpush1.msra.mxu0 %v1571
        %1590 = vmatprep.subr.mxu0 0.0
        %1591 = vmatpush1.msra.mxu0 %v1572
        %1592 = vmatprep.subr.mxu0 0.0
        %1593 = vmatpush1.msra.mxu0 %v1573
        %1594 = vmatprep.subr.mxu0 0.0
        %1595 = vmatpush1.msra.mxu0 %v1574
        %1596 = vmatprep.subr.mxu0 0.0
        %1597 = vmatpush1.msra.mxu0 %v1575
        %1598 = vmatprep.subr.mxu0 0.0
        %1599 = vmatpush1.msra.mxu0 %v1576
        %1600 = vmatprep.subr.mxu0 0.0
        %1601 = vmatpush1.msra.mxu0 %v1577
        %1602 = vmatprep.subr.mxu0 0.0
        %1603 = vmatpush1.msra.mxu0 %v1578
        %1604 = vmatprep.subr.mxu0 0.0
        %1605 = vmatpush1.msra.mxu0 %v1579
        %1606 = vmatprep.subr.mxu0 0.0
        %1607 = vmatpush1.msra.mxu0 %v1580
        %1608 = vmatprep.subr.mxu0 0.0
        %1609 = vmatpush1.msra.mxu0 %v1581
        %1610 = vmatprep.subr.mxu0 0.0
        %1611 = vmatpush1.msra.mxu0 %v1582
        %1612 = vmatprep.subr.mxu0 0.0
        %1613 = vmatpush1.msra.mxu0 %v1583
        %1614 = vmatprep.subr.mxu0 0.0
        %1615 = vmatpush1.msra.mxu0 %v1584
        %1616 = vmatprep.subr.mxu0 0.0
        %1617 = vmatpush1.msra.mxu0 %v1585
        %1618 = vmatprep.subr.mxu0 0.0
        %1619 = vmatpush1.msra.mxu0 0.0
        %1620 = vmatprep.subr.mxu0 0.0
        %1621 = vmatpush1.msra.mxu0 0.0
        %1622 = vmatprep.subr.mxu0 0.0
        %1623 = vmatpush1.msra.mxu0 0.0
        %1624 = vmatprep.subr.mxu0 0.0
        %1625 = vmatpush1.msra.mxu0 0.0
        %1626 = vmatprep.subr.mxu0 0.0
        %1627 = vmatpush1.msra.mxu0 0.0
        %1628 = vmatprep.subr.mxu0 0.0
        %1629 = vmatpush1.msra.mxu0 0.0
        %1630 = vmatprep.subr.mxu0 0.0
        %1631 = vmatpush1.msra.mxu0 0.0
        %1632 = vmatprep.subr.mxu0 0.0
        %1633 = vmatpush1.msra.mxu0 0.0
        %1634 = vmatprep.subr.mxu0 0.0
        %1635 = vmatpush1.msra.mxu0 0.0
        %1636 = vmatprep.subr.mxu0 0.0
        %1637 = vmatpush1.msra.mxu0 0.0
        %1638 = vmatprep.subr.mxu0 0.0
        %1639 = vmatpush1.msra.mxu0 0.0
        %1640 = vmatprep.subr.mxu0 0.0
        %1641 = vmatpush1.msra.mxu0 0.0
        %1642 = vmatprep.subr.mxu0 0.0
        %1643 = vmatpush1.msra.mxu0 0.0
        %1644 = vmatprep.subr.mxu0 0.0
        %1645 = vmatpush1.msra.mxu0 0.0
        %1646 = vmatprep.subr.mxu0 0.0
        %1647 = vmatpush1.msra.mxu0 0.0
        %1648 = vmatprep.subr.mxu0 0.0
        %1649 = vmatpush1.msra.mxu0 0.0
        %1650 = vmatprep.mubr.f32.mxu0 0.0
        %1651 = vmatmul.mubr.f32.gmra.mrb[0].mxu0 %v1554
        %v1652 = vpop.f32.mrb[0].mxu0
        %v1653 = vadd.f32 0.0, %v1652
        %v1654 = vpop.f32.mrb[0].mxu0
        %1655 = vmatprep.mubr.f32.mxu0 0.0
        %1656 = vmatmul.mubr.f32.gmra.mrb[0].mxu0 %v1555
        %v1657 = vpop.f32.mrb[0].mxu0
        %v1658 = vadd.f32 0.0, %v1657
        %v1659 = vpop.f32.mrb[0].mxu0
        %1660 = vmatprep.mubr.f32.mxu0 0.0
        %1661 = vmatmul.mubr.f32.gmra.mrb[0].mxu0 %v1556
        %v1662 = vpop.f32.mrb[0].mxu0
        %v1663 = vadd.f32 0.0, %v1662
        %v1664 = vpop.f32.mrb[0].mxu0
        %1665 = vmatprep.mubr.f32.mxu0 0.0
        %1666 = vmatmul.mubr.f32.gmra.mrb[0].mxu0 %v1557
        %v1667 = vpop.f32.mrb[0].mxu0
        %v1668 = vadd.f32 0.0, %v1667
        %v1669 = vpop.f32.mrb[0].mxu0
        %1670 = vmatprep.mubr.f32.mxu0 0.0
        %1671 = vmatmul.mubr.f32.gmra.mrb[0].mxu0 %v1558
        %v1672 = vpop.f32.mrb[0].mxu0
        %v1673 = vadd.f32 0.0, %v1672
        %v1674 = vpop.f32.mrb[0].mxu0
        %1675 = vmatprep.mubr.f32.mxu0 0.0
        %1676 = vmatmul.mubr.f32.gmra.mrb[0].mxu0 %v1559
        %v1677 = vpop.f32.mrb[0].mxu0
        %v1678 = vadd.f32 0.0, %v1677
        %v1679 = vpop.f32.mrb[0].mxu0
        %1680 = vmatprep.mubr.f32.mxu0 0.0
        %1681 = vmatmul.mubr.f32.gmra.mrb[0].mxu0 %v1560
        %v1682 = vpop.f32.mrb[0].mxu0
        %v1683 = vadd.f32 0.0, %v1682
        %v1684 = vpop.f32.mrb[0].mxu0
        %1685 = vmatprep.mubr.f32.mxu0 0.0
        %1686 = vmatmul.mubr.f32.gmra.mrb[0].mxu0 %v1561
        %v1687 = vpop.f32.mrb[0].mxu0
        %v1688 = vadd.f32 0.0, %v1687
        %v1689 = vpop.f32.mrb[0].mxu0
        %1690 = vmatprep.mubr.f32.mxu0 0.0
        %1691 = vmatmul.mubr.f32.gmra.mrb[0].mxu0 %v1562
        %v1692 = vpop.f32.mrb[0].mxu0
        %v1693 = vadd.f32 0.0, %v1692
        %v1694 = vpop.f32.mrb[0].mxu0
        %1695 = vmatprep.mubr.f32.mxu0 0.0
        %1696 = vmatmul.mubr.f32.gmra.mrb[0].mxu0 %v1563
        %v1697 = vpop.f32.mrb[0].mxu0
        %v1698 = vadd.f32 0.0, %v1697
        %v1699 = vpop.f32.mrb[0].mxu0
        %1700 = vmatprep.mubr.f32.mxu0 0.0
        %1701 = vmatmul.mubr.f32.gmra.mrb[0].mxu0 %v1564
        %v1702 = vpop.f32.mrb[0].mxu0
        %v1703 = vadd.f32 0.0, %v1702
        %v1704 = vpop.f32.mrb[0].mxu0
        %1705 = vmatprep.mubr.f32.mxu0 0.0
        %1706 = vmatmul.mubr.f32.gmra.mrb[0].mxu0 %v1565
        %v1707 = vpop.f32.mrb[0].mxu0
        %v1708 = vadd.f32 0.0, %v1707
        %v1709 = vpop.f32.mrb[0].mxu0
        %1710 = vmatprep.mubr.f32.mxu0 0.0
        %1711 = vmatmul.mubr.f32.gmra.mrb[0].mxu0 %v1566
        %v1712 = vpop.f32.mrb[0].mxu0
        %v1713 = vadd.f32 0.0, %v1712
        %v1714 = vpop.f32.mrb[0].mxu0
        %1715 = vmatprep.mubr.f32.mxu0 0.0
        %1716 = vmatmul.mubr.f32.gmra.mrb[0].mxu0 %v1567
        %v1717 = vpop.f32.mrb[0].mxu0
        %v1718 = vadd.f32 0.0, %v1717
        %v1719 = vpop.f32.mrb[0].mxu0
        %1720 = vmatprep.mubr.f32.mxu0 0.0
        %1721 = vmatmul.mubr.f32.gmra.mrb[0].mxu0 %v1568
        %v1722 = vpop.f32.mrb[0].mxu0
        %v1723 = vadd.f32 0.0, %v1722
        %v1724 = vpop.f32.mrb[0].mxu0
        %1725 = vmatprep.mubr.f32.mxu0 0.0
        %1726 = vmatmul.mubr.f32.gmra.mrb[0].mxu0 %v1569
        %v1727 = vpop.f32.mrb[0].mxu0
        %v1728 = vadd.f32 0.0, %v1727
        %v1729 = vpop.f32.mrb[0].mxu0
        %1730 = vdwg.mxu0
        %1731 = vadd.xlane.f32.xlu0 %v1653
        %v1732 = vpop.xlane.xlu0 %1731
        %1733 = vadd.xlane.f32.xlu0 %v1658
        %v1734 = vpop.xlane.xlu0 %1733
        %1735 = vadd.xlane.f32.xlu0 %v1663
        %v1736 = vpop.xlane.xlu0 %1735
        %1737 = vadd.xlane.f32.xlu0 %v1668
        %v1738 = vpop.xlane.xlu0 %1737
        %1739 = vadd.xlane.f32.xlu0 %v1673
        %v1740 = vpop.xlane.xlu0 %1739
        %1741 = vadd.xlane.f32.xlu0 %v1678
        %v1742 = vpop.xlane.xlu0 %1741
        %1743 = vadd.xlane.f32.xlu0 %v1683
        %v1744 = vpop.xlane.xlu0 %1743
        %1745 = vadd.xlane.f32.xlu0 %v1688
        %v1746 = vpop.xlane.xlu0 %1745
        %1747 = vadd.xlane.f32.xlu0 %v1693
        %v1748 = vpop.xlane.xlu0 %1747
        %1749 = vadd.xlane.f32.xlu0 %v1698
        %v1750 = vpop.xlane.xlu0 %1749
        %1751 = vadd.xlane.f32.xlu0 %v1703
        %v1752 = vpop.xlane.xlu0 %1751
        %1753 = vadd.xlane.f32.xlu0 %v1708
        %v1754 = vpop.xlane.xlu0 %1753
        %1755 = vadd.xlane.f32.xlu0 %v1713
        %v1756 = vpop.xlane.xlu0 %1755
        %1757 = vadd.xlane.f32.xlu0 %v1718
        %v1758 = vpop.xlane.xlu0 %1757
        %1759 = vadd.xlane.f32.xlu0 %v1723
        %v1760 = vpop.xlane.xlu0 %1759
        %1761 = vadd.xlane.f32.xlu0 %v1728
        %v1762 = vpop.xlane.xlu0 %1761
        %v1763 = vmul.f32 %v1732, %v676
        %v1764 = vmul.f32 %v1734, %v676
        %v1765 = vmul.f32 %v1736, %v676
        %v1766 = vmul.f32 %v1738, %v676
        %v1767 = vmul.f32 %v1740, %v676
        %v1768 = vmul.f32 %v1742, %v676
        %v1769 = vmul.f32 %v1744, %v676
        %v1770 = vmul.f32 %v1746, %v676
        %v1771 = vmul.f32 %v1748, %v676
        %v1772 = vmul.f32 %v1750, %v676
        %v1773 = vmul.f32 %v1752, %v676
        %v1774 = vmul.f32 %v1754, %v676
        %v1775 = vmul.f32 %v1756, %v676
        %v1776 = vmul.f32 %v1758, %v676
        %v1777 = vmul.f32 %v1760, %v676
        %v1778 = vmul.f32 %v1762, %v676
        %v1779 = vmul.f32 %v1653, %v1653
        %v1780 = vmul.f32 %v1658, %v1658
        %v1781 = vmul.f32 %v1663, %v1663
        %v1782 = vmul.f32 %v1668, %v1668
        %v1783 = vmul.f32 %v1673, %v1673
        %v1784 = vmul.f32 %v1678, %v1678
        %v1785 = vmul.f32 %v1683, %v1683
        %v1786 = vmul.f32 %v1688, %v1688
        %v1787 = vmul.f32 %v1693, %v1693
        %v1788 = vmul.f32 %v1698, %v1698
        %v1789 = vmul.f32 %v1703, %v1703
        %v1790 = vmul.f32 %v1708, %v1708
        %v1791 = vmul.f32 %v1713, %v1713
        %v1792 = vmul.f32 %v1718, %v1718
        %v1793 = vmul.f32 %v1723, %v1723
        %v1794 = vmul.f32 %v1728, %v1728
        %1795 = vadd.xlane.f32.xlu0 %v1779
        %v1796 = vpop.xlane.xlu0 %1795
        %1797 = vadd.xlane.f32.xlu0 %v1780
        %v1798 = vpop.xlane.xlu0 %1797
        %1799 = vadd.xlane.f32.xlu0 %v1781
        %v1800 = vpop.xlane.xlu0 %1799
        %1801 = vadd.xlane.f32.xlu0 %v1782
        %v1802 = vpop.xlane.xlu0 %1801
        %1803 = vadd.xlane.f32.xlu0 %v1783
        %v1804 = vpop.xlane.xlu0 %1803
        %1805 = vadd.xlane.f32.xlu0 %v1784
        %v1806 = vpop.xlane.xlu0 %1805
        %1807 = vadd.xlane.f32.xlu0 %v1785
        %v1808 = vpop.xlane.xlu0 %1807
        %1809 = vadd.xlane.f32.xlu0 %v1786
        %v1810 = vpop.xlane.xlu0 %1809
        %1811 = vadd.xlane.f32.xlu0 %v1787
        %v1812 = vpop.xlane.xlu0 %1811
        %1813 = vadd.xlane.f32.xlu0 %v1788
        %v1814 = vpop.xlane.xlu0 %1813
        %1815 = vadd.xlane.f32.xlu0 %v1789
        %v1816 = vpop.xlane.xlu0 %1815
        %1817 = vadd.xlane.f32.xlu0 %v1790
        %v1818 = vpop.xlane.xlu0 %1817
        %1819 = vadd.xlane.f32.xlu0 %v1791
        %v1820 = vpop.xlane.xlu0 %1819
        %1821 = vadd.xlane.f32.xlu0 %v1792
        %v1822 = vpop.xlane.xlu0 %1821
        %1823 = vadd.xlane.f32.xlu0 %v1793
        %v1824 = vpop.xlane.xlu0 %1823
        %1825 = vadd.xlane.f32.xlu0 %v1794
        %v1826 = vpop.xlane.xlu0 %1825
        %v1827 = vmul.f32 %v1796, %v676
        %v1828 = vmul.f32 %v1798, %v676
        %v1829 = vmul.f32 %v1800, %v676
        %v1830 = vmul.f32 %v1802, %v676
        %v1831 = vmul.f32 %v1804, %v676
        %v1832 = vmul.f32 %v1806, %v676
        %v1833 = vmul.f32 %v1808, %v676
        %v1834 = vmul.f32 %v1810, %v676
        %v1835 = vmul.f32 %v1812, %v676
        %v1836 = vmul.f32 %v1814, %v676
        %v1837 = vmul.f32 %v1816, %v676
        %v1838 = vmul.f32 %v1818, %v676
        %v1839 = vmul.f32 %v1820, %v676
        %v1840 = vmul.f32 %v1822, %v676
        %v1841 = vmul.f32 %v1824, %v676
        %v1842 = vmul.f32 %v1826, %v676
        %v1843 = vmul.f32 %v1763, %v1763
        %v1844 = vmul.f32 %v1764, %v1764
        %v1845 = vmul.f32 %v1765, %v1765
        %v1846 = vmul.f32 %v1766, %v1766
        %v1847 = vmul.f32 %v1767, %v1767
        %v1848 = vmul.f32 %v1768, %v1768
        %v1849 = vmul.f32 %v1769, %v1769
        %v1850 = vmul.f32 %v1770, %v1770
        %v1851 = vmul.f32 %v1771, %v1771
        %v1852 = vmul.f32 %v1772, %v1772
        %v1853 = vmul.f32 %v1773, %v1773
        %v1854 = vmul.f32 %v1774, %v1774
        %v1855 = vmul.f32 %v1775, %v1775
        %v1856 = vmul.f32 %v1776, %v1776
        %v1857 = vmul.f32 %v1777, %v1777
        %v1858 = vmul.f32 %v1778, %v1778
        %v1859 = vsub.f32 %v1827, %v1843
        %v1860 = vsub.f32 %v1828, %v1844
        %v1861 = vsub.f32 %v1829, %v1845
        %v1862 = vsub.f32 %v1830, %v1846
        %v1863 = vsub.f32 %v1831, %v1847
        %v1864 = vsub.f32 %v1832, %v1848
        %v1865 = vsub.f32 %v1833, %v1849
        %v1866 = vsub.f32 %v1834, %v1850
        %v1867 = vsub.f32 %v1835, %v1851
        %v1868 = vsub.f32 %v1836, %v1852
        %v1869 = vsub.f32 %v1837, %v1853
        %v1870 = vsub.f32 %v1838, %v1854
        %v1871 = vsub.f32 %v1839, %v1855
        %v1872 = vsub.f32 %v1840, %v1856
        %v1873 = vsub.f32 %v1841, %v1857
        %v1874 = vsub.f32 %v1842, %v1858
        %v1875 = vld [vmem:[%s8] sm:$0x1]
        %v1876 = vadd.f32 %v1859, 0.001
        %v1877 = vadd.f32 %v1860, 0.001
        %v1878 = vadd.f32 %v1861, 0.001
        %v1879 = vadd.f32 %v1862, 0.001
        %v1880 = vadd.f32 %v1863, 0.001
        %v1881 = vadd.f32 %v1864, 0.001
        %v1882 = vadd.f32 %v1865, 0.001
        %v1883 = vadd.f32 %v1866, 0.001
        %v1884 = vadd.f32 %v1867, 0.001
        %v1885 = vadd.f32 %v1868, 0.001
        %v1886 = vadd.f32 %v1869, 0.001
        %v1887 = vadd.f32 %v1870, 0.001
        %v1888 = vadd.f32 %v1871, 0.001
        %v1889 = vadd.f32 %v1872, 0.001
        %v1890 = vadd.f32 %v1873, 0.001
        %v1891 = vadd.f32 %v1874, 0.001
        %v1892 = vrsqrt.pop %v1876
        %v1893 = vrsqrt.pop %v1877
        %v1894 = vrsqrt.pop %v1878
        %v1895 = vrsqrt.pop %v1879
        %v1896 = vrsqrt.pop %v1880
        %v1897 = vrsqrt.pop %v1881
        %v1898 = vrsqrt.pop %v1882
        %v1899 = vrsqrt.pop %v1883
        %v1900 = vrsqrt.pop %v1884
        %v1901 = vrsqrt.pop %v1885
        %v1902 = vrsqrt.pop %v1886
        %v1903 = vrsqrt.pop %v1887
        %v1904 = vrsqrt.pop %v1888
        %v1905 = vrsqrt.pop %v1889
        %v1906 = vrsqrt.pop %v1890
        %v1907 = vrsqrt.pop %v1891
        %v1909 = vlaneseq
        %v1910 = vshrl.u32 %v1909, 7
        %v1911 = vsub.s32 0, %v1910
        %v1912 = vrot.slane %v1875, %v1911
        %v1914 = vmul.f32 %v1912, %v1892
        %v1915 = vmul.f32 %v1912, %v1893
        %v1916 = vmul.f32 %v1912, %v1894
        %v1917 = vmul.f32 %v1912, %v1895
        %v1918 = vmul.f32 %v1912, %v1896
        %v1919 = vmul.f32 %v1912, %v1897
        %v1920 = vmul.f32 %v1912, %v1898
        %v1921 = vmul.f32 %v1912, %v1899
        %v1922 = vmul.f32 %v1912, %v1900
        %v1923 = vmul.f32 %v1912, %v1901
        %v1924 = vmul.f32 %v1912, %v1902
        %v1925 = vmul.f32 %v1912, %v1903
        %v1926 = vmul.f32 %v1912, %v1904
        %v1927 = vmul.f32 %v1912, %v1905
        %v1928 = vmul.f32 %v1912, %v1906
        %v1929 = vmul.f32 %v1912, %v1907
        %v1930 = vld [vmem:[%s9] sm:$0x1]
        %v1931 = vmul.f32 %v1763, %v1914
        %v1932 = vmul.f32 %v1764, %v1915
        %v1933 = vmul.f32 %v1765, %v1916
        %v1934 = vmul.f32 %v1766, %v1917
        %v1935 = vmul.f32 %v1767, %v1918
        %v1936 = vmul.f32 %v1768, %v1919
        %v1937 = vmul.f32 %v1769, %v1920
        %v1938 = vmul.f32 %v1770, %v1921
        %v1939 = vmul.f32 %v1771, %v1922
        %v1940 = vmul.f32 %v1772, %v1923
        %v1941 = vmul.f32 %v1773, %v1924
        %v1942 = vmul.f32 %v1774, %v1925
        %v1943 = vmul.f32 %v1775, %v1926
        %v1944 = vmul.f32 %v1776, %v1927
        %v1945 = vmul.f32 %v1777, %v1928
        %v1946 = vmul.f32 %v1778, %v1929
        %v1948 = vlaneseq
        %v1949 = vshrl.u32 %v1948, 7
        %v1950 = vsub.s32 0, %v1949
        %v1951 = vrot.slane %v1930, %v1950
        %v1953 = vsub.f32 %v1951, %v1931
        %v1954 = vsub.f32 %v1951, %v1932
        %v1955 = vsub.f32 %v1951, %v1933
        %v1956 = vsub.f32 %v1951, %v1934
        %v1957 = vsub.f32 %v1951, %v1935
        %v1958 = vsub.f32 %v1951, %v1936
        %v1959 = vsub.f32 %v1951, %v1937
        %v1960 = vsub.f32 %v1951, %v1938
        %v1961 = vsub.f32 %v1951, %v1939
        %v1962 = vsub.f32 %v1951, %v1940
        %v1963 = vsub.f32 %v1951, %v1941
        %v1964 = vsub.f32 %v1951, %v1942
        %v1965 = vsub.f32 %v1951, %v1943
        %v1966 = vsub.f32 %v1951, %v1944
        %v1967 = vsub.f32 %v1951, %v1945
        %v1968 = vsub.f32 %v1951, %v1946
        %v1969 = vmul.f32 %v1653, %v1914
        %v1970 = vmul.f32 %v1658, %v1915
        %v1971 = vmul.f32 %v1663, %v1916
        %v1972 = vmul.f32 %v1668, %v1917
        %v1973 = vmul.f32 %v1673, %v1918
        %v1974 = vmul.f32 %v1678, %v1919
        %v1975 = vmul.f32 %v1683, %v1920
        %v1976 = vmul.f32 %v1688, %v1921
        %v1977 = vmul.f32 %v1693, %v1922
        %v1978 = vmul.f32 %v1698, %v1923
        %v1979 = vmul.f32 %v1703, %v1924
        %v1980 = vmul.f32 %v1708, %v1925
        %v1981 = vmul.f32 %v1713, %v1926
        %v1982 = vmul.f32 %v1718, %v1927
        %v1983 = vmul.f32 %v1723, %v1928
        %v1984 = vmul.f32 %v1728, %v1929
        %v1985 = vadd.f32 %v1969, %v1953
        %v1986 = vadd.f32 %v1970, %v1954
        %v1987 = vadd.f32 %v1971, %v1955
        %v1988 = vadd.f32 %v1972, %v1956
        %v1989 = vadd.f32 %v1973, %v1957
        %v1990 = vadd.f32 %v1974, %v1958
        %v1991 = vadd.f32 %v1975, %v1959
        %v1992 = vadd.f32 %v1976, %v1960
        %v1993 = vadd.f32 %v1977, %v1961
        %v1994 = vadd.f32 %v1978, %v1962
        %v1995 = vadd.f32 %v1979, %v1963
        %v1996 = vadd.f32 %v1980, %v1964
        %v1997 = vadd.f32 %v1981, %v1965
        %v1998 = vadd.f32 %v1982, %v1966
        %v1999 = vadd.f32 %v1983, %v1967
        %v2000 = vadd.f32 %v1984, %v1968
        %v2001 = vxor.u32 %v1985, 2147483648
        %v2002 = vxor.u32 %v1986, 2147483648
        %v2003 = vxor.u32 %v1987, 2147483648
        %v2004 = vxor.u32 %v1988, 2147483648
        %v2005 = vxor.u32 %v1989, 2147483648
        %v2006 = vxor.u32 %v1990, 2147483648
        %v2007 = vxor.u32 %v1991, 2147483648
        %v2008 = vxor.u32 %v1992, 2147483648
        %v2009 = vxor.u32 %v1993, 2147483648
        %v2010 = vxor.u32 %v1994, 2147483648
        %v2011 = vxor.u32 %v1995, 2147483648
        %v2012 = vxor.u32 %v1996, 2147483648
        %v2013 = vxor.u32 %v1997, 2147483648
        %v2014 = vxor.u32 %v1998, 2147483648
        %v2015 = vxor.u32 %v1999, 2147483648
        %v2016 = vxor.u32 %v2000, 2147483648
        %v2017 = vmul.f32 %v2001, 1.442695
        %v2018 = vpow.pop %v2017
        %v2019 = vmul.f32 %v2002, 1.442695
        %v2020 = vpow.pop %v2019
        %v2021 = vmul.f32 %v2003, 1.442695
        %v2022 = vpow.pop %v2021
        %v2023 = vmul.f32 %v2004, 1.442695
        %v2024 = vpow.pop %v2023
        %v2025 = vmul.f32 %v2005, 1.442695
        %v2026 = vpow.pop %v2025
        %v2027 = vmul.f32 %v2006, 1.442695
        %v2028 = vpow.pop %v2027
        %v2029 = vmul.f32 %v2007, 1.442695
        %v2030 = vpow.pop %v2029
        %v2031 = vmul.f32 %v2008, 1.442695
        %v2032 = vpow.pop %v2031
        %v2033 = vmul.f32 %v2009, 1.442695
        %v2034 = vpow.pop %v2033
        %v2035 = vmul.f32 %v2010, 1.442695
        %v2036 = vpow.pop %v2035
        %v2037 = vmul.f32 %v2011, 1.442695
        %v2038 = vpow.pop %v2037
        %v2039 = vmul.f32 %v2012, 1.442695
        %v2040 = vpow.pop %v2039
        %v2041 = vmul.f32 %v2013, 1.442695
        %v2042 = vpow.pop %v2041
        %v2043 = vmul.f32 %v2014, 1.442695
        %v2044 = vpow.pop %v2043
        %v2045 = vmul.f32 %v2015, 1.442695
        %v2046 = vpow.pop %v2045
        %v2047 = vmul.f32 %v2016, 1.442695
        %v2048 = vpow.pop %v2047
        %v2049 = vadd.f32 %v2018, 1.0
        %v2050 = vadd.f32 %v2020, 1.0
        %v2051 = vadd.f32 %v2022, 1.0
        %v2052 = vadd.f32 %v2024, 1.0
        %v2053 = vadd.f32 %v2026, 1.0
        %v2054 = vadd.f32 %v2028, 1.0
        %v2055 = vadd.f32 %v2030, 1.0
        %v2056 = vadd.f32 %v2032, 1.0
        %v2057 = vadd.f32 %v2034, 1.0
        %v2058 = vadd.f32 %v2036, 1.0
        %v2059 = vadd.f32 %v2038, 1.0
        %v2060 = vadd.f32 %v2040, 1.0
        %v2061 = vadd.f32 %v2042, 1.0
        %v2062 = vadd.f32 %v2044, 1.0
        %v2063 = vadd.f32 %v2046, 1.0
        %v2064 = vadd.f32 %v2048, 1.0
        %v2065 = vrcp.pop %v2049
        %v2066 = vmul.f32 1.0, %v2065
        %v2067 = vrcp.pop %v2050
        %v2068 = vmul.f32 1.0, %v2067
        %v2069 = vrcp.pop %v2051
        %v2070 = vmul.f32 1.0, %v2069
        %v2071 = vrcp.pop %v2052
        %v2072 = vmul.f32 1.0, %v2071
        %v2073 = vrcp.pop %v2053
        %v2074 = vmul.f32 1.0, %v2073
        %v2075 = vrcp.pop %v2054
        %v2076 = vmul.f32 1.0, %v2075
        %v2077 = vrcp.pop %v2055
        %v2078 = vmul.f32 1.0, %v2077
        %v2079 = vrcp.pop %v2056
        %v2080 = vmul.f32 1.0, %v2079
        %v2081 = vrcp.pop %v2057
        %v2082 = vmul.f32 1.0, %v2081
        %v2083 = vrcp.pop %v2058
        %v2084 = vmul.f32 1.0, %v2083
        %v2085 = vrcp.pop %v2059
        %v2086 = vmul.f32 1.0, %v2085
        %v2087 = vrcp.pop %v2060
        %v2088 = vmul.f32 1.0, %v2087
        %v2089 = vrcp.pop %v2061
        %v2090 = vmul.f32 1.0, %v2089
        %v2091 = vrcp.pop %v2062
        %v2092 = vmul.f32 1.0, %v2091
        %v2093 = vrcp.pop %v2063
        %v2094 = vmul.f32 1.0, %v2093
        %v2095 = vrcp.pop %v2064
        %v2096 = vmul.f32 1.0, %v2095
        %v2097 = vmul.f32 %v1985, %v2066
        %v2098 = vmul.f32 %v1986, %v2068
        %v2099 = vmul.f32 %v1987, %v2070
        %v2100 = vmul.f32 %v1988, %v2072
        %v2101 = vmul.f32 %v1989, %v2074
        %v2102 = vmul.f32 %v1990, %v2076
        %v2103 = vmul.f32 %v1991, %v2078
        %v2104 = vmul.f32 %v1992, %v2080
        %v2105 = vmul.f32 %v1993, %v2082
        %v2106 = vmul.f32 %v1994, %v2084
        %v2107 = vmul.f32 %v1995, %v2086
        %v2108 = vmul.f32 %v1996, %v2088
        %v2109 = vmul.f32 %v1997, %v2090
        %v2110 = vmul.f32 %v1998, %v2092
        %v2111 = vmul.f32 %v1999, %v2094
        %v2112 = vmul.f32 %v2000, %v2096
        %v2113 = vld [vmem:[#allocation2] sm:$0xff]
        %v2114 = vld [vmem:[#allocation2 + $0x8] sm:$0xff]
        %v2115 = vld [vmem:[#allocation2 + $0x10] sm:$0xff]
        %v2116 = vld [vmem:[#allocation2 + $0x18] sm:$0xff]
        %v2117 = vld [vmem:[#allocation2 + $0x20] sm:$0xff]
        %v2118 = vld [vmem:[#allocation2 + $0x28] sm:$0xff]
        %v2119 = vld [vmem:[#allocation2 + $0x30] sm:$0xff]
        %v2120 = vld [vmem:[#allocation2 + $0x38] sm:$0xff]
        %v2121 = vld [vmem:[#allocation2 + $0x40] sm:$0xff]
        %v2122 = vld [vmem:[#allocation2 + $0x48] sm:$0xff]
        %v2123 = vld [vmem:[#allocation2 + $0x50] sm:$0xff]
        %v2124 = vld [vmem:[#allocation2 + $0x58] sm:$0xff]
        %v2125 = vld [vmem:[#allocation2 + $0x60] sm:$0xff]
        %v2126 = vld [vmem:[#allocation2 + $0x68] sm:$0xff]
        %v2127 = vld [vmem:[#allocation2 + $0x70] sm:$0xff]
        %v2128 = vld [vmem:[#allocation2 + $0x78] sm:$0xff]
        %v2129 = vld [vmem:[%s11] sm:$0x1]
        %v2131 = vlaneseq
        %v2132 = vshrl.u32 %v2131, 7
        %v2133 = vsub.s32 0, %v2132
        %v2134 = vrot.slane %v2129, %v2133
        %2136 = vmatprep.subr.mxu0 0.0
        %2137 = vmatpush1.msra.mxu0 %v2113
        %2138 = vmatprep.subr.mxu0 0.0
        %2139 = vmatpush1.msra.mxu0 %v2114
        %2140 = vmatprep.subr.mxu0 0.0
        %2141 = vmatpush1.msra.mxu0 %v2115
        %2142 = vmatprep.subr.mxu0 0.0
        %2143 = vmatpush1.msra.mxu0 %v2116
        %2144 = vmatprep.subr.mxu0 0.0
        %2145 = vmatpush1.msra.mxu0 %v2117
        %2146 = vmatprep.subr.mxu0 0.0
        %2147 = vmatpush1.msra.mxu0 %v2118
        %2148 = vmatprep.subr.mxu0 0.0
        %2149 = vmatpush1.msra.mxu0 %v2119
        %2150 = vmatprep.subr.mxu0 0.0
        %2151 = vmatpush1.msra.mxu0 %v2120
        %2152 = vmatprep.subr.mxu0 0.0
        %2153 = vmatpush1.msra.mxu0 %v2121
        %2154 = vmatprep.subr.mxu0 0.0
        %2155 = vmatpush1.msra.mxu0 %v2122
        %2156 = vmatprep.subr.mxu0 0.0
        %2157 = vmatpush1.msra.mxu0 %v2123
        %2158 = vmatprep.subr.mxu0 0.0
        %2159 = vmatpush1.msra.mxu0 %v2124
        %2160 = vmatprep.subr.mxu0 0.0
        %2161 = vmatpush1.msra.mxu0 %v2125
        %2162 = vmatprep.subr.mxu0 0.0
        %2163 = vmatpush1.msra.mxu0 %v2126
        %2164 = vmatprep.subr.mxu0 0.0
        %2165 = vmatpush1.msra.mxu0 %v2127
        %2166 = vmatprep.subr.mxu0 0.0
        %2167 = vmatpush1.msra.mxu0 %v2128
        %2168 = vmatprep.subr.mxu0 0.0
        %2169 = vmatpush1.msra.mxu0 0.0
        %2170 = vmatprep.subr.mxu0 0.0
        %2171 = vmatpush1.msra.mxu0 0.0
        %2172 = vmatprep.subr.mxu0 0.0
        %2173 = vmatpush1.msra.mxu0 0.0
        %2174 = vmatprep.subr.mxu0 0.0
        %2175 = vmatpush1.msra.mxu0 0.0
        %2176 = vmatprep.subr.mxu0 0.0
        %2177 = vmatpush1.msra.mxu0 0.0
        %2178 = vmatprep.subr.mxu0 0.0
        %2179 = vmatpush1.msra.mxu0 0.0
        %2180 = vmatprep.subr.mxu0 0.0
        %2181 = vmatpush1.msra.mxu0 0.0
        %2182 = vmatprep.subr.mxu0 0.0
        %2183 = vmatpush1.msra.mxu0 0.0
        %2184 = vmatprep.subr.mxu0 0.0
        %2185 = vmatpush1.msra.mxu0 0.0
        %2186 = vmatprep.subr.mxu0 0.0
        %2187 = vmatpush1.msra.mxu0 0.0
        %2188 = vmatprep.subr.mxu0 0.0
        %2189 = vmatpush1.msra.mxu0 0.0
        %2190 = vmatprep.subr.mxu0 0.0
        %2191 = vmatpush1.msra.mxu0 0.0
        %2192 = vmatprep.subr.mxu0 0.0
        %2193 = vmatpush1.msra.mxu0 0.0
        %2194 = vmatprep.subr.mxu0 0.0
        %2195 = vmatpush1.msra.mxu0 0.0
        %2196 = vmatprep.subr.mxu0 0.0
        %2197 = vmatpush1.msra.mxu0 0.0
        %2198 = vmatprep.subr.mxu0 0.0
        %2199 = vmatpush1.msra.mxu0 0.0
        %2200 = vmatprep.mubr.f32.mxu0 0.0
        %2201 = vmatmul.mubr.f32.gmra.mrb[0].mxu0 %v2097
        %v2202 = vpop.f32.mrb[0].mxu0
        %v2203 = vadd.f32 %v2134, %v2202
        %v2204 = vpop.f32.mrb[0].mxu0
        %2205 = vmatprep.mubr.f32.mxu0 0.0
        %2206 = vmatmul.mubr.f32.gmra.mrb[0].mxu0 %v2098
        %v2207 = vpop.f32.mrb[0].mxu0
        %v2208 = vadd.f32 %v2134, %v2207
        %v2209 = vpop.f32.mrb[0].mxu0
        %2210 = vmatprep.mubr.f32.mxu0 0.0
        %2211 = vmatmul.mubr.f32.gmra.mrb[0].mxu0 %v2099
        %v2212 = vpop.f32.mrb[0].mxu0
        %v2213 = vadd.f32 %v2134, %v2212
        %v2214 = vpop.f32.mrb[0].mxu0
        %2215 = vmatprep.mubr.f32.mxu0 0.0
        %2216 = vmatmul.mubr.f32.gmra.mrb[0].mxu0 %v2100
        %v2217 = vpop.f32.mrb[0].mxu0
        %v2218 = vadd.f32 %v2134, %v2217
        %v2219 = vpop.f32.mrb[0].mxu0
        %2220 = vmatprep.mubr.f32.mxu0 0.0
        %2221 = vmatmul.mubr.f32.gmra.mrb[0].mxu0 %v2101
        %v2222 = vpop.f32.mrb[0].mxu0
        %v2223 = vadd.f32 %v2134, %v2222
        %v2224 = vpop.f32.mrb[0].mxu0
        %2225 = vmatprep.mubr.f32.mxu0 0.0
        %2226 = vmatmul.mubr.f32.gmra.mrb[0].mxu0 %v2102
        %v2227 = vpop.f32.mrb[0].mxu0
        %v2228 = vadd.f32 %v2134, %v2227
        %v2229 = vpop.f32.mrb[0].mxu0
        %2230 = vmatprep.mubr.f32.mxu0 0.0
        %2231 = vmatmul.mubr.f32.gmra.mrb[0].mxu0 %v2103
        %v2232 = vpop.f32.mrb[0].mxu0
        %v2233 = vadd.f32 %v2134, %v2232
        %v2234 = vpop.f32.mrb[0].mxu0
        %2235 = vmatprep.mubr.f32.mxu0 0.0
        %2236 = vmatmul.mubr.f32.gmra.mrb[0].mxu0 %v2104
        %v2237 = vpop.f32.mrb[0].mxu0
        %v2238 = vadd.f32 %v2134, %v2237
        %v2239 = vpop.f32.mrb[0].mxu0
        %2240 = vmatprep.mubr.f32.mxu0 0.0
        %2241 = vmatmul.mubr.f32.gmra.mrb[0].mxu0 %v2105
        %v2242 = vpop.f32.mrb[0].mxu0
        %v2243 = vadd.f32 %v2134, %v2242
        %v2244 = vpop.f32.mrb[0].mxu0
        %2245 = vmatprep.mubr.f32.mxu0 0.0
        %2246 = vmatmul.mubr.f32.gmra.mrb[0].mxu0 %v2106
        %v2247 = vpop.f32.mrb[0].mxu0
        %v2248 = vadd.f32 %v2134, %v2247
        %v2249 = vpop.f32.mrb[0].mxu0
        %2250 = vmatprep.mubr.f32.mxu0 0.0
        %2251 = vmatmul.mubr.f32.gmra.mrb[0].mxu0 %v2107
        %v2252 = vpop.f32.mrb[0].mxu0
        %v2253 = vadd.f32 %v2134, %v2252
        %v2254 = vpop.f32.mrb[0].mxu0
        %2255 = vmatprep.mubr.f32.mxu0 0.0
        %2256 = vmatmul.mubr.f32.gmra.mrb[0].mxu0 %v2108
        %v2257 = vpop.f32.mrb[0].mxu0
        %v2258 = vadd.f32 %v2134, %v2257
        %v2259 = vpop.f32.mrb[0].mxu0
        %2260 = vmatprep.mubr.f32.mxu0 0.0
        %2261 = vmatmul.mubr.f32.gmra.mrb[0].mxu0 %v2109
        %v2262 = vpop.f32.mrb[0].mxu0
        %v2263 = vadd.f32 %v2134, %v2262
        %v2264 = vpop.f32.mrb[0].mxu0
        %2265 = vmatprep.mubr.f32.mxu0 0.0
        %2266 = vmatmul.mubr.f32.gmra.mrb[0].mxu0 %v2110
        %v2267 = vpop.f32.mrb[0].mxu0
        %v2268 = vadd.f32 %v2134, %v2267
        %v2269 = vpop.f32.mrb[0].mxu0
        %2270 = vmatprep.mubr.f32.mxu0 0.0
        %2271 = vmatmul.mubr.f32.gmra.mrb[0].mxu0 %v2111
        %v2272 = vpop.f32.mrb[0].mxu0
        %v2273 = vadd.f32 %v2134, %v2272
        %v2274 = vpop.f32.mrb[0].mxu0
        %2275 = vmatprep.mubr.f32.mxu0 0.0
        %2276 = vmatmul.mubr.f32.gmra.mrb[0].mxu0 %v2112
        %v2277 = vpop.f32.mrb[0].mxu0
        %v2278 = vadd.f32 %v2134, %v2277
        %v2279 = vpop.f32.mrb[0].mxu0
        %2280 = vdwg.mxu0
        %v2281 = vtanh.pop %v2203
        %v2282 = vtanh.pop %v2208
        %v2283 = vtanh.pop %v2213
        %v2284 = vtanh.pop %v2218
        %v2285 = vtanh.pop %v2223
        %v2286 = vtanh.pop %v2228
        %v2287 = vtanh.pop %v2233
        %v2288 = vtanh.pop %v2238
        %v2289 = vtanh.pop %v2243
        %v2290 = vtanh.pop %v2248
        %v2291 = vtanh.pop %v2253
        %v2292 = vtanh.pop %v2258
        %v2293 = vtanh.pop %v2263
        %v2294 = vtanh.pop %v2268
        %v2295 = vtanh.pop %v2273
        %v2296 = vtanh.pop %v2278
        %2297 = vst [vmem:[%s422] sm:$0xff] %v2281
        %2298 = vst [vmem:[%s422 + $0x8] sm:$0xff] %v2282
        %2299 = vst [vmem:[%s422 + $0x10] sm:$0xff] %v2283
        %2300 = vst [vmem:[%s422 + $0x18] sm:$0xff] %v2284
        %2301 = vst [vmem:[%s422 + $0x20] sm:$0xff] %v2285
        %2302 = vst [vmem:[%s422 + $0x28] sm:$0xff] %v2286
        %2303 = vst [vmem:[%s422 + $0x30] sm:$0xff] %v2287
        %2304 = vst [vmem:[%s422 + $0x38] sm:$0xff] %v2288
        %2305 = vst [vmem:[%s422 + $0x40] sm:$0xff] %v2289
        %2306 = vst [vmem:[%s422 + $0x48] sm:$0xff] %v2290
        %2307 = vst [vmem:[%s422 + $0x50] sm:$0xff] %v2291
        %2308 = vst [vmem:[%s422 + $0x58] sm:$0xff] %v2292
        %2309 = vst [vmem:[%s422 + $0x60] sm:$0xff] %v2293
        %2310 = vst [vmem:[%s422 + $0x68] sm:$0xff] %v2294
        %2311 = vst [vmem:[%s422 + $0x70] sm:$0xff] %v2295
        %2312 = vst [vmem:[%s422 + $0x78] sm:$0xff] %v2296
        %s2313 = sand.u32 %s292, 1
        %s2314 = scalar_lea.sflag [#allocation4], %s2313
        %s2315 = sand.u32 %s292, 1
        %s2316 = smul.addr %s2315, 128
        %s2317 = scalar_lea.vmem [#allocation5], %s2316
        // Predicated region
        $region73: #{tpu_custom_call.1} parent=67 // pred_check
          %p2318 = pneg %p302
        $region74: #{tpu_custom_call.1} parent=67 // pred_check_branch
          %2320 = sbr.rel (%p2318) target = $region76
        $region75: #{tpu_custom_call.1} parent=67 // pred_region
          %s2321 = smul.u32 16, %s27
          %s2323 = ssub.s32 2048, 2048
          %2324 = vsyncadd %s2314, %s2323
          %s2325 = smul.addr %s2321, 128
          %s2326 = scalar_lea.hbm %s12, %s2325
          %s2327 = sshll.u32 %s2317, 4
          %s2328 = int_to_ptr.vmem [resolvable:$true] %s2327
          %2333 = dma.vmem_to_hbm [thread:$0]  %s2328, 2048, %s2326, %s2314, 128, 128, 8
        $region76: #{tpu_custom_call.1} parent=67 // pred_fallthru
          _
      $region68: #{tpu_custom_call.1} parent=5 // pred_fallthru
        _
      %p2334 = scmp.le.s32.totalorder 2, %s22
      // Predicated region
      $region77: #{tpu_custom_call.1} parent=5 // pred_check
        %p2335 = pneg %p2334
      $region78: #{tpu_custom_call.1} parent=5 // pred_check_branch
        %2337 = sbr.rel (%p2335) target = $region80
      $region79: #{tpu_custom_call.1} parent=5 // pred_region
        %s2338 = ssub.s32 %s22, 2
        // Predicated region
        $region81: #{tpu_custom_call.1} parent=79 // pred_check
          %p2339 = pneg %p308
        $region82: #{tpu_custom_call.1} parent=79 // pred_check_branch
          %2341 = sbr.rel (%p2339) target = $region84
        $region83: #{tpu_custom_call.1} parent=79 // pred_region
          %s2342 = sand.u32 %s293, 1
          %s2343 = scalar_lea.sflag [#allocation4], %s2342
          %s2344 = sand.u32 %s293, 1
          %s2345 = smul.addr %s2344, 128
          %s2346 = scalar_lea.vmem [#allocation5], %s2345
          %2347 = dma.done %s2343, 2048
        $region84: #{tpu_custom_call.1} parent=79 // pred_fallthru
          _
      $region80: #{tpu_custom_call.1} parent=5 // pred_fallthru
        _
    $region6: #{tpu_custom_call.1} parent=1 // loop_footer
      %s26 = sadd.s32 1, %s22
    $region7: #{tpu_custom_call.1} parent=1 // loop_footer_branch
      %21 = sbr.rel target = $region3
    $region8: #{tpu_custom_call.1} parent=1 // loop_exit
      _
    %2348 = vsyncpa [#allocation3], 1
    %s2349 = scalar_lea.sflag [#allocation3], 1
    %2350 = vsyncpa %s2349, 1
    %2351 = vsyncpa [#allocation4], 1
    %s2352 = scalar_lea.sflag [#allocation4], 1
    %2353 = vsyncpa %s2352, 1

</llo_original>
